<compile_context>
chip_gen: v7x
topology: tpu7x:2x2x1
jax: 0.10.0
libtpu: 0.0.40
codegen_flags: <defaults>
</compile_context>

<pallas_src>
import functools

import jax
import jax.numpy as jnp
from jax import lax
from jax.experimental import pallas as pl
from jax.experimental.pallas import tpu as pltpu

_MiB = 1024 * 1024


def _round_down_128(x):
    return max(128, x // 128 * 128)


def _vmem_capacity_bytes():
    try:
        return pltpu.get_tpu_info().vmem_capacity_bytes
    except Exception:
        return 64 * _MiB  # conservative (v7x-sized) fallback


def _scoped_vmem_limit(working_set_bytes):
    # Explicit scoped-VMEM request: above v5e/v6e's 16/32 MiB defaults, with
    # headroom below physical capacity (64 MiB on v7x, 128 MiB on v5e/v6e).
    cap = _vmem_capacity_bytes()
    hi = min(int(cap * 0.8), 112 * _MiB)
    return int(min(hi, max(32 * _MiB, working_set_bytes + 8 * _MiB)))


# ---------------------------------------------------------------------------
# Kernel 1: statistics as a tiled reduction over the sampled columns,
# operating on the native (N, block, Ls) layout (no transpose, no pad).
#   mean_ref   accumulates the per-row column sum      -> mean1 = sum / (N*Ls)
#   deconv_ref accumulates the Gram matrix x1_s@x1_s.T -> cov -> isqrt(cov)
# Newton-Schulz + bias are computed only on the last grid step.
# ---------------------------------------------------------------------------
def _stats_kernel(xs_ref, mean_ref, deconv_ref, bias_ref, *,
                  ls, ls_total, eps, n_iter, block, tile_s, need_mask):
    ni = pl.program_id(0)
    ti = pl.program_id(1)

    @pl.when(jnp.logical_and(ni == 0, ti == 0))
    def _init():
        mean_ref[...] = jnp.zeros_like(mean_ref)
        deconv_ref[...] = jnp.zeros_like(deconv_ref)

    xs = xs_ref[0].astype(jnp.float32)  # (block, tile_s)
    if need_mask:
        # Ragged last tile: out-of-bounds columns are undefined -> zero them.
        col = ti * tile_s + lax.broadcasted_iota(jnp.int32, xs.shape, 1)
        xs = jnp.where(col < ls, xs, 0.0)
    mean_ref[...] += jnp.sum(xs, axis=-1, keepdims=True)
    deconv_ref[...] += lax.dot_general(  # xs @ xs.T
        xs, xs, (((1,), (1,)), ((), ())), preferred_element_type=jnp.float32
    )

    last = jnp.logical_and(ni == pl.num_programs(0) - 1,
                           ti == pl.num_programs(1) - 1)

    @pl.when(last)
    def _finalize():
        eye = jnp.eye(block, dtype=jnp.float32)
        mean = mean_ref[...] / ls_total
        # Uncentered Gram + eps*I, exactly as the reference PyTorch module.
        cov = deconv_ref[...] / ls_total + eps * eye
        norm_a = jnp.sqrt(jnp.sum(cov * cov))  # Frobenius norm
        y = cov / norm_a
        z = eye
        for _ in range(n_iter):
            t = 0.5 * (3.0 * eye - jnp.dot(z, y, preferred_element_type=jnp.float32))
            y = jnp.dot(y, t, preferred_element_type=jnp.float32)
            z = jnp.dot(t, z, preferred_element_type=jnp.float32)
        dec = z / jnp.sqrt(norm_a)
        mean_ref[...] = mean
        deconv_ref[...] = dec
        bias_ref[...] = -jnp.dot(dec, mean, preferred_element_type=jnp.float32)


def _compute_stats(xs, block, eps, n_iter):
    n, _, ls = xs.shape
    in_bytes = jnp.dtype(xs.dtype).itemsize
    # ~4 MiB per input tile: per-step DMA time dwarfs the ~0.35 us pipeline
    # overhead while the double-buffered working set stays small everywhere.
    max_tile = _round_down_128((4 * _MiB) // (block * in_bytes))
    tile_s = ls if ls <= max_tile else max_tile  # full-extent or 128-multiple
    t_s = pl.cdiv(ls, tile_s)
    need_mask = (t_s * tile_s != ls)

    kern = functools.partial(
        _stats_kernel, ls=ls, ls_total=n * ls, eps=eps, n_iter=n_iter,
        block=block, tile_s=tile_s, need_mask=need_mask)
    ws = 2 * block * tile_s * in_bytes + 3 * block * block * 4
    mean1, deconv, bias = pl.pallas_call(
        kern,
        grid=(n, t_s),
        in_specs=[pl.BlockSpec((1, block, tile_s), lambda ni, ti: (ni, 0, ti))],
        out_specs=(
            pl.BlockSpec((block, 1), lambda ni, ti: (0, 0)),
            pl.BlockSpec((block, block), lambda ni, ti: (0, 0)),
            pl.BlockSpec((block, 1), lambda ni, ti: (0, 0)),
        ),
        out_shape=(
            jax.ShapeDtypeStruct((block, 1), jnp.float32),
            jax.ShapeDtypeStruct((block, block), jnp.float32),
            jax.ShapeDtypeStruct((block, 1), jnp.float32),
        ),
        compiler_params=pltpu.CompilerParams(
            dimension_semantics=("arbitrary", "arbitrary"),
            vmem_limit_bytes=_scoped_vmem_limit(ws)),
    )(xs)
    return mean1, deconv, bias


# ---------------------------------------------------------------------------
# Kernel 2: whitening apply  out = deconv @ x + bias   (bias = -deconv @ mean)
# 2-D parallel grid on the fused (N, block, g*H*W) view; x streams in its
# original dtype, accumulation in f32, writeback in the original dtype.
# ---------------------------------------------------------------------------
def _apply_kernel(deconv_ref, bias_ref, x_ref, out_ref):
    xb = x_ref[0].astype(jnp.float32)  # (block, tile_l)
    acc = jnp.dot(deconv_ref[...], xb, preferred_element_type=jnp.float32)
    out_ref[0] = (acc + bias_ref[...]).astype(out_ref.dtype)


def _pick_tile_l(block, length, in_bytes, out_bytes):
    # Working set = double-buffered in + out tiles (deconv/bias are tiny).
    # Generation-aware budget: ~38 MiB on v7x (64 MiB VMEM), capped at 48 MiB
    # on v5e/v6e (128 MiB VMEM).
    cap = _vmem_capacity_bytes()
    ws_budget = min(int(cap * 0.6), 48 * _MiB)
    per_col = 2 * block * (in_bytes + out_bytes)  # 2x = double buffering
    max_tile = _round_down_128(ws_budget // per_col)
    if length <= max_tile:
        return length  # single full-extent lane block
    # Prefer a tile that divides `length`: every store stays an unmasked
    # lane-dense vst and no matmul work is wasted on out-of-bounds columns.
    t = max_tile
    floor = max(128, max_tile // 2)
    while t >= floor:
        if length % t == 0:
            return t
        t -= 128
    return max_tile


def _apply_deconv(deconv, bias, xv, block):
    n, _, length = xv.shape
    in_bytes = jnp.dtype(xv.dtype).itemsize
    out_dtype = xv.dtype
    out_bytes = jnp.dtype(out_dtype).itemsize
    tile_l = _pick_tile_l(block, length, in_bytes, out_bytes)
    t_tiles = pl.cdiv(length, tile_l)

    # Larger axis first keeps the 2-TensorCore (v7x) megacore split balanced.
    if t_tiles >= n:
        grid = (t_tiles, n)
        xmap = lambda ti, ni: (ni, 0, ti)
    else:
        grid = (n, t_tiles)
        xmap = lambda ni, ti: (ni, 0, ti)
    cmap = lambda a, b: (0, 0)

    ws = 2 * block * tile_l * (in_bytes + out_bytes) + 2 * block * (block + 1) * 4
    return pl.pallas_call(
        _apply_kernel,
        grid=grid,
        in_specs=[
            pl.BlockSpec((block, block), cmap),
            pl.BlockSpec((block, 1), cmap),
            pl.BlockSpec((1, block, tile_l), xmap),
        ],
        out_specs=pl.BlockSpec((1, block, tile_l), xmap),
        out_shape=jax.ShapeDtypeStruct((n, block, length), out_dtype),
        compiler_params=pltpu.CompilerParams(
            dimension_semantics=("parallel", "parallel"),
            vmem_limit_bytes=_scoped_vmem_limit(ws)),
    )(deconv, bias, xv)


# ---------------------------------------------------------------------------
# Full forward (glue reshapes / remainder-channel branch stay in plain JAX).
# ---------------------------------------------------------------------------
def channel_deconv_forward(x, block, eps=0.01, n_iter=5, sampling_stride=3):
    orig_shape = x.shape
    if x.ndim == 2:
        x = x.reshape(x.shape[0], x.shape[1], 1, 1)
    n, ch, h, w = x.shape
    b = block
    g = ch // b
    c = g * b
    assert c > 0, "Error! block should be set smaller."

    xg = x if c == ch else x[:, :c]
    xv = xg.reshape(n, b, g * h * w)  # free view: row b <-> channels [b*g,(b+1)*g)

    if sampling_stride > 1 and h >= sampling_stride and w >= sampling_stride:
        xs = xv[:, :, :: sampling_stride ** 2]  # equivalent strided subsample
    else:
        xs = xv

    mean1, deconv, bias = _compute_stats(xs, b, eps, n_iter)
    del mean1  # only needed for the (omitted) running-buffer EMA updates

    yv = _apply_deconv(deconv, bias, xv, b)
    y1 = yv.reshape(n, c, h, w)  # free view back to NCHW

    if c != ch:
        x_rest = x[:, c:]
        x_tmp = x_rest.reshape(n, -1)
        if sampling_stride > 1 and h >= sampling_stride and w >= sampling_stride:
            x_s = x_tmp[:, :: sampling_stride ** 2]
        else:
            x_s = x_tmp
        x_s32 = x_s.astype(jnp.float32)
        mean2 = jnp.mean(x_s32)
        var = jnp.var(x_s32, ddof=1)  # torch .var() is unbiased
        x_rest = ((x_rest.astype(jnp.float32) - mean2)
                  / jnp.sqrt(var + eps)).astype(x.dtype)
        y1 = jnp.concatenate([y1, x_rest], axis=1)

    if len(orig_shape) == 2:
        y1 = y1.reshape(orig_shape)
    return y1


# ---------------------------------------------------------------------------
# Pure-JAX reference (same sampling layout as the kernel path) for validation.
# ---------------------------------------------------------------------------
def _reference_forward(x, block, eps=0.01, n_iter=5, sampling_stride=3):
    hp = lax.Precision.HIGHEST
    x = x.astype(jnp.float32)
    n, ch, h, w = x.shape
    g = ch // block
    c = g * block
    xv = x[:, :c].reshape(n, block, g * h * w)
    if sampling_stride > 1 and h >= sampling_stride and w >= sampling_stride:
        xs = xv[:, :, :: sampling_stride ** 2]
    else:
        xs = xv
    x1_s = jnp.transpose(xs, (1, 0, 2)).reshape(block, -1)
    ls = x1_s.shape[1]
    mean1 = jnp.mean(x1_s, axis=-1, keepdims=True)
    eye = jnp.eye(block, dtype=jnp.float32)
    cov = jnp.dot(x1_s, x1_s.T, precision=hp) / ls + eps * eye
    norm_a = jnp.sqrt(jnp.sum(cov * cov))
    y = cov / norm_a
    z = eye
    for _ in range(n_iter):
        t = 0.5 * (3.0 * eye - jnp.dot(z, y, precision=hp))
        y = jnp.dot(y, t, precision=hp)
        z = jnp.dot(t, z, precision=hp)
    deconv = z / jnp.sqrt(norm_a)
    xc = xv - mean1[None, :, :]
    yv = jnp.einsum("ij,njk->nik", deconv, xc, precision=hp)
    y1 = yv.reshape(n, c, h, w)
    if c != ch:
        x_rest = x[:, c:]
        x_tmp = x_rest.reshape(n, -1)
        if sampling_stride > 1 and h >= sampling_stride and w >= sampling_stride:
            x_s = x_tmp[:, :: sampling_stride ** 2]
        else:
            x_s = x_tmp
        mean2 = jnp.mean(x_s)
        var = jnp.var(x_s, ddof=1)
        x_rest = (x_rest - mean2) / jnp.sqrt(var + eps)
        y1 = jnp.concatenate([y1, x_rest], axis=1)
    return y1


if __name__ == "__main__":
    key = jax.random.PRNGKey(0)
    # NCHW input, block=4 divides C exactly -> whitening path fully exercised.
    x = jax.random.normal(key, (2, 4, 16, 16), dtype=jnp.float32)

    out = channel_deconv_forward(x, block=4, eps=0.01, n_iter=5, sampling_stride=3)
    out = jax.block_until_ready(out)

    assert out.shape == x.shape
    assert out.dtype == jnp.float32
    assert bool(jnp.all(jnp.isfinite(out)))

    ref = jax.block_until_ready(
        _reference_forward(x, block=4, eps=0.01, n_iter=5, sampling_stride=3)
    )
    assert bool(jnp.allclose(out, ref, atol=2e-2, rtol=2e-2)), float(
        jnp.max(jnp.abs(out - ref))
    )
    print("KERNEL_OK")
</pallas_src>

<mosaic_0001>
module attributes {stable_mosaic.version = 11 : i64} {
  func.func @_stats_kernel(%arg0: i32, %arg1: i32, %arg2: memref<1x4x29xf32, #tpu.memory_space<vmem>>, %arg3: memref<4x1xf32, #tpu.memory_space<vmem>>, %arg4: memref<4x4xf32, #tpu.memory_space<vmem>>, %arg5: memref<4x1xf32, #tpu.memory_space<vmem>>) attributes {dimension_semantics = [#tpu.dimension_semantics<arbitrary>, #tpu.dimension_semantics<arbitrary>], iteration_bounds = array<i64: 2, 1>, scalar_prefetch = 0 : i64, scratch_operands = 0 : i64, tpu.core_type = #tpu.core_type<tc>, window_params = [{transform_indices = @transform_0, window_bounds = array<i64: 1, 4, 29>}, {pipeline_mode = #tpu.pipeline_mode<synchronous>, transform_indices = @transform_1, window_bounds = array<i64: 4, 1>}, {pipeline_mode = #tpu.pipeline_mode<synchronous>, transform_indices = @transform_2, window_bounds = array<i64: 4, 4>}, {pipeline_mode = #tpu.pipeline_mode<synchronous>, transform_indices = @transform_3, window_bounds = array<i64: 4, 1>}]} {
    %c0_i32 = arith.constant 0 : i32
    %0 = arith.cmpi eq, %arg0, %c0_i32 : i32
    %c0_i32_0 = arith.constant 0 : i32
    %1 = arith.cmpi eq, %arg1, %c0_i32_0 : i32
    %2 = arith.andi %0, %1 : i1
    %3 = arith.extui %2 : i1 to i32
    %c0_i32_1 = arith.constant 0 : i32
    %4 = arith.cmpi ne, %3, %c0_i32_1 : i32
    scf.if %4 {
      %cst_15 = arith.constant 0.000000e+00 : f32
      %21 = vector.broadcast %cst_15 : f32 to vector<4x1xf32>
      %c0_16 = arith.constant 0 : index
      %c0_17 = arith.constant 0 : index
      %22 = vector.load %arg3[%c0_16, %c0_17] : memref<4x1xf32, #tpu.memory_space<vmem>>, vector<4x1xf32>
      tpu.vector_store %arg3[%c0_16, %c0_17], %21 {strides = array<i32>} : memref<4x1xf32, #tpu.memory_space<vmem>>, vector<4x1xf32>,
      %cst_18 = arith.constant 0.000000e+00 : f32
      %23 = vector.broadcast %cst_18 : f32 to vector<4x4xf32>
      %c0_19 = arith.constant 0 : index
      %c0_20 = arith.constant 0 : index
      %24 = vector.load %arg4[%c0_19, %c0_20] : memref<4x4xf32, #tpu.memory_space<vmem>>, vector<4x4xf32>
      tpu.vector_store %arg4[%c0_19, %c0_20], %23 {strides = array<i32>} : memref<4x4xf32, #tpu.memory_space<vmem>>, vector<4x4xf32>,
    } else {
    }
    %c0 = arith.constant 0 : index
    %c0_2 = arith.constant 0 : index
    %c0_3 = arith.constant 0 : index
    %5 = vector.load %arg2[%c0, %c0_2, %c0_3] : memref<1x4x29xf32, #tpu.memory_space<vmem>>, vector<1x4x29xf32>
    %6 = vector.shape_cast %5 : vector<1x4x29xf32> to vector<4x29xf32>
    %c0_4 = arith.constant 0 : index
    %c0_5 = arith.constant 0 : index
    %7 = vector.load %arg3[%c0_4, %c0_5] : memref<4x1xf32, #tpu.memory_space<vmem>>, vector<4x1xf32>
    %cst = arith.constant dense<0.000000e+00> : vector<4xf32>
    %8 = vector.multi_reduction <add>, %6, %cst [1] : vector<4x29xf32> to vector<4xf32>
    %9 = vector.shape_cast %8 : vector<4xf32> to vector<4x1xf32>
    %10 = arith.addf %7, %9 : vector<4x1xf32>
    %c0_6 = arith.constant 0 : index
    %c0_7 = arith.constant 0 : index
    %11 = vector.load %arg3[%c0_6, %c0_7] : memref<4x1xf32, #tpu.memory_space<vmem>>, vector<4x1xf32>
    tpu.vector_store %arg3[%c0_6, %c0_7], %10 {strides = array<i32>} : memref<4x1xf32, #tpu.memory_space<vmem>>, vector<4x1xf32>,
    %c0_8 = arith.constant 0 : index
    %c0_9 = arith.constant 0 : index
    %12 = vector.load %arg4[%c0_8, %c0_9] : memref<4x4xf32, #tpu.memory_space<vmem>>, vector<4x4xf32>
    %cst_10 = arith.constant dense<0.000000e+00> : vector<4x4xf32>
    %13 = tpu.matmul %6, %6, %cst_10 {dimension_numbers = #tpu.dot_dimension_numbers<[1], [1], [0], [0], [0, 0, 1, 0], [], []>} : vector<4x29xf32>, vector<4x29xf32>, vector<4x4xf32> -> vector<4x4xf32>
    %14 = arith.addf %12, %13 : vector<4x4xf32>
    %c0_11 = arith.constant 0 : index
    %c0_12 = arith.constant 0 : index
    %15 = vector.load %arg4[%c0_11, %c0_12] : memref<4x4xf32, #tpu.memory_space<vmem>>, vector<4x4xf32>
    tpu.vector_store %arg4[%c0_11, %c0_12], %14 {strides = array<i32>} : memref<4x4xf32, #tpu.memory_space<vmem>>, vector<4x4xf32>,
    %c1_i32 = arith.constant 1 : i32
    %16 = arith.cmpi eq, %arg0, %c1_i32 : i32
    %c0_i32_13 = arith.constant 0 : i32
    %17 = arith.cmpi eq, %arg1, %c0_i32_13 : i32
    %18 = arith.andi %16, %17 : i1
    %19 = arith.extui %18 : i1 to i32
    %c0_i32_14 = arith.constant 0 : i32
    %20 = arith.cmpi ne, %19, %c0_i32_14 : i32
    scf.if %20 {
      %21 = tpu.iota {dimensions = array<i32: 0>} : vector<4x4xi32>
      %22 = tpu.iota {dimensions = array<i32: 1>} : vector<4x4xi32>
      %c0_i32_15 = arith.constant 0 : i32
      %23 = vector.broadcast %c0_i32_15 : i32 to vector<4x4xi32>
      %24 = arith.addi %21, %23 : vector<4x4xi32>
      %25 = arith.cmpi eq, %24, %22 : vector<4x4xi32>
      %26 = arith.extui %25 : vector<4x4xi1> to vector<4x4xi32>
      %27 = arith.sitofp %26 : vector<4x4xi32> to vector<4x4xf32>
      %c0_16 = arith.constant 0 : index
      %c0_17 = arith.constant 0 : index
      %28 = vector.load %arg3[%c0_16, %c0_17] : memref<4x1xf32, #tpu.memory_space<vmem>>, vector<4x1xf32>
      %cst_18 = arith.constant 5.800000e+01 : f32
      %29 = vector.broadcast %cst_18 : f32 to vector<4x1xf32>
      %30 = arith.divf %28, %29 : vector<4x1xf32>
      %c0_19 = arith.constant 0 : index
      %c0_20 = arith.constant 0 : index
      %31 = vector.load %arg4[%c0_19, %c0_20] : memref<4x4xf32, #tpu.memory_space<vmem>>, vector<4x4xf32>
      %cst_21 = arith.constant 5.800000e+01 : f32
      %32 = vector.broadcast %cst_21 : f32 to vector<4x4xf32>
      %33 = arith.divf %31, %32 : vector<4x4xf32>
      %cst_22 = arith.constant 0.00999999977 : f32
      %34 = vector.broadcast %cst_22 : f32 to vector<4x4xf32>
      %35 = arith.mulf %34, %27 : vector<4x4xf32>
      %36 = arith.addf %33, %35 : vector<4x4xf32>
      %37 = arith.mulf %36, %36 : vector<4x4xf32>
      %38 = vector.shape_cast %37 : vector<4x4xf32> to vector<1x4x4xf32>
      %cst_23 = arith.constant dense<0.000000e+00> : vector<1xf32>
      %39 = vector.multi_reduction <add>, %38, %cst_23 [1, 2] : vector<1x4x4xf32> to vector<1xf32>
      %40 = vector.shape_cast %39 : vector<1xf32> to vector<1x1x1xf32>
      %41 = vector.extract %40[0, 0, 0] : f32 from vector<1x1x1xf32>
      %42 = math.sqrt %41 : f32
      %43 = vector.broadcast %42 : f32 to vector<4x4xf32>
      %44 = arith.divf %36, %43 : vector<4x4xf32>
      %cst_24 = arith.constant 3.000000e+00 : f32
      %45 = vector.broadcast %cst_24 : f32 to vector<4x4xf32>
      %46 = arith.mulf %45, %27 : vector<4x4xf32>
      %cst_25 = arith.constant dense<0.000000e+00> : vector<4x4xf32>
      %47 = tpu.matmul %27, %44, %cst_25 {dimension_numbers = #tpu.dot_dimension_numbers<[1], [0], [0], [1], [0, 0, 1, 1], [], []>} : vector<4x4xf32>, vector<4x4xf32>, vector<4x4xf32> -> vector<4x4xf32>
      %48 = arith.subf %46, %47 : vector<4x4xf32>
      %cst_26 = arith.constant 5.000000e-01 : f32
      %49 = vector.broadcast %cst_26 : f32 to vector<4x4xf32>
      %50 = arith.mulf %49, %48 : vector<4x4xf32>
      %cst_27 = arith.constant dense<0.000000e+00> : vector<4x4xf32>
      %51 = tpu.matmul %44, %50, %cst_27 {dimension_numbers = #tpu.dot_dimension_numbers<[1], [0], [0], [1], [0, 0, 1, 1], [], []>} : vector<4x4xf32>, vector<4x4xf32>, vector<4x4xf32> -> vector<4x4xf32>
      %cst_28 = arith.constant dense<0.000000e+00> : vector<4x4xf32>
      %52 = tpu.matmul %50, %27, %cst_28 {dimension_numbers = #tpu.dot_dimension_numbers<[1], [0], [0], [1], [0, 0, 1, 1], [], []>} : vector<4x4xf32>, vector<4x4xf32>, vector<4x4xf32> -> vector<4x4xf32>
      %cst_29 = arith.constant 3.000000e+00 : f32
      %53 = vector.broadcast %cst_29 : f32 to vector<4x4xf32>
      %54 = arith.mulf %53, %27 : vector<4x4xf32>
      %cst_30 = arith.constant dense<0.000000e+00> : vector<4x4xf32>
      %55 = tpu.matmul %52, %51, %cst_30 {dimension_numbers = #tpu.dot_dimension_numbers<[1], [0], [0], [1], [0, 0, 1, 1], [], []>} : vector<4x4xf32>, vector<4x4xf32>, vector<4x4xf32> -> vector<4x4xf32>
      %56 = arith.subf %54, %55 : vector<4x4xf32>
      %cst_31 = arith.constant 5.000000e-01 : f32
      %57 = vector.broadcast %cst_31 : f32 to vector<4x4xf32>
      %58 = arith.mulf %57, %56 : vector<4x4xf32>
      %cst_32 = arith.constant dense<0.000000e+00> : vector<4x4xf32>
      %59 = tpu.matmul %51, %58, %cst_32 {dimension_numbers = #tpu.dot_dimension_numbers<[1], [0], [0], [1], [0, 0, 1, 1], [], []>} : vector<4x4xf32>, vector<4x4xf32>, vector<4x4xf32> -> vector<4x4xf32>
      %cst_33 = arith.constant dense<0.000000e+00> : vector<4x4xf32>
      %60 = tpu.matmul %58, %52, %cst_33 {dimension_numbers = #tpu.dot_dimension_numbers<[1], [0], [0], [1], [0, 0, 1, 1], [], []>} : vector<4x4xf32>, vector<4x4xf32>, vector<4x4xf32> -> vector<4x4xf32>
      %cst_34 = arith.constant 3.000000e+00 : f32
      %61 = vector.broadcast %cst_34 : f32 to vector<4x4xf32>
      %62 = arith.mulf %61, %27 : vector<4x4xf32>
      %cst_35 = arith.constant dense<0.000000e+00> : vector<4x4xf32>
      %63 = tpu.matmul %60, %59, %cst_35 {dimension_numbers = #tpu.dot_dimension_numbers<[1], [0], [0], [1], [0, 0, 1, 1], [], []>} : vector<4x4xf32>, vector<4x4xf32>, vector<4x4xf32> -> vector<4x4xf32>
      %64 = arith.subf %62, %63 : vector<4x4xf32>
      %cst_36 = arith.constant 5.000000e-01 : f32
      %65 = vector.broadcast %cst_36 : f32 to vector<4x4xf32>
      %66 = arith.mulf %65, %64 : vector<4x4xf32>
      %cst_37 = arith.constant dense<0.000000e+00> : vector<4x4xf32>
      %67 = tpu.matmul %59, %66, %cst_37 {dimension_numbers = #tpu.dot_dimension_numbers<[1], [0], [0], [1], [0, 0, 1, 1], [], []>} : vector<4x4xf32>, vector<4x4xf32>, vector<4x4xf32> -> vector<4x4xf32>
      %cst_38 = arith.constant dense<0.000000e+00> : vector<4x4xf32>
      %68 = tpu.matmul %66, %60, %cst_38 {dimension_numbers = #tpu.dot_dimension_numbers<[1], [0], [0], [1], [0, 0, 1, 1], [], []>} : vector<4x4xf32>, vector<4x4xf32>, vector<4x4xf32> -> vector<4x4xf32>
      %cst_39 = arith.constant 3.000000e+00 : f32
      %69 = vector.broadcast %cst_39 : f32 to vector<4x4xf32>
      %70 = arith.mulf %69, %27 : vector<4x4xf32>
      %cst_40 = arith.constant dense<0.000000e+00> : vector<4x4xf32>
      %71 = tpu.matmul %68, %67, %cst_40 {dimension_numbers = #tpu.dot_dimension_numbers<[1], [0], [0], [1], [0, 0, 1, 1], [], []>} : vector<4x4xf32>, vector<4x4xf32>, vector<4x4xf32> -> vector<4x4xf32>
      %72 = arith.subf %70, %71 : vector<4x4xf32>
      %cst_41 = arith.constant 5.000000e-01 : f32
      %73 = vector.broadcast %cst_41 : f32 to vector<4x4xf32>
      %74 = arith.mulf %73, %72 : vector<4x4xf32>
      %cst_42 = arith.constant dense<0.000000e+00> : vector<4x4xf32>
      %75 = tpu.matmul %67, %74, %cst_42 {dimension_numbers = #tpu.dot_dimension_numbers<[1], [0], [0], [1], [0, 0, 1, 1], [], []>} : vector<4x4xf32>, vector<4x4xf32>, vector<4x4xf32> -> vector<4x4xf32>
      %cst_43 = arith.constant dense<0.000000e+00> : vector<4x4xf32>
      %76 = tpu.matmul %74, %68, %cst_43 {dimension_numbers = #tpu.dot_dimension_numbers<[1], [0], [0], [1], [0, 0, 1, 1], [], []>} : vector<4x4xf32>, vector<4x4xf32>, vector<4x4xf32> -> vector<4x4xf32>
      %cst_44 = arith.constant 3.000000e+00 : f32
      %77 = vector.broadcast %cst_44 : f32 to vector<4x4xf32>
      %78 = arith.mulf %77, %27 : vector<4x4xf32>
      %cst_45 = arith.constant dense<0.000000e+00> : vector<4x4xf32>
      %79 = tpu.matmul %76, %75, %cst_45 {dimension_numbers = #tpu.dot_dimension_numbers<[1], [0], [0], [1], [0, 0, 1, 1], [], []>} : vector<4x4xf32>, vector<4x4xf32>, vector<4x4xf32> -> vector<4x4xf32>
      %80 = arith.subf %78, %79 : vector<4x4xf32>
      %cst_46 = arith.constant 5.000000e-01 : f32
      %81 = vector.broadcast %cst_46 : f32 to vector<4x4xf32>
      %82 = arith.mulf %81, %80 : vector<4x4xf32>
      %cst_47 = arith.constant dense<0.000000e+00> : vector<4x4xf32>
      %83 = tpu.matmul %82, %76, %cst_47 {dimension_numbers = #tpu.dot_dimension_numbers<[1], [0], [0], [1], [0, 0, 1, 1], [], []>} : vector<4x4xf32>, vector<4x4xf32>, vector<4x4xf32> -> vector<4x4xf32>
      %84 = math.sqrt %42 : f32
      %85 = vector.broadcast %84 : f32 to vector<4x4xf32>
      %86 = arith.divf %83, %85 : vector<4x4xf32>
      %c0_48 = arith.constant 0 : index
      %c0_49 = arith.constant 0 : index
      %87 = vector.load %arg3[%c0_48, %c0_49] : memref<4x1xf32, #tpu.memory_space<vmem>>, vector<4x1xf32>
      tpu.vector_store %arg3[%c0_48, %c0_49], %30 {strides = array<i32>} : memref<4x1xf32, #tpu.memory_space<vmem>>, vector<4x1xf32>,
      %c0_50 = arith.constant 0 : index
      %c0_51 = arith.constant 0 : index
      %88 = vector.load %arg4[%c0_50, %c0_51] : memref<4x4xf32, #tpu.memory_space<vmem>>, vector<4x4xf32>
      tpu.vector_store %arg4[%c0_50, %c0_51], %86 {strides = array<i32>} : memref<4x4xf32, #tpu.memory_space<vmem>>, vector<4x4xf32>,
      %cst_52 = arith.constant dense<0.000000e+00> : vector<4x1xf32>
      %89 = tpu.matmul %86, %30, %cst_52 {dimension_numbers = #tpu.dot_dimension_numbers<[1], [0], [0], [1], [0, 0, 1, 1], [], []>} : vector<4x4xf32>, vector<4x1xf32>, vector<4x1xf32> -> vector<4x1xf32>
      %cst_53 = arith.constant 0.000000e+00 : f32
      %90 = vector.broadcast %cst_53 : f32 to vector<4x1xf32>
      %91 = arith.subf %90, %89 : vector<4x1xf32>
      %c0_54 = arith.constant 0 : index
      %c0_55 = arith.constant 0 : index
      %92 = vector.load %arg5[%c0_54, %c0_55] : memref<4x1xf32, #tpu.memory_space<vmem>>, vector<4x1xf32>
      tpu.vector_store %arg5[%c0_54, %c0_55], %91 {strides = array<i32>} : memref<4x1xf32, #tpu.memory_space<vmem>>, vector<4x1xf32>,
    } else {
    }
    return
  }
  func.func @transform_0(%arg0: i32, %arg1: i32) -> (i32, i32, i32) {
    %c0_i32 = arith.constant 0 : i32
    %c0_i32_0 = arith.constant 0 : i32
    return %arg0, %c0_i32, %arg1 : i32, i32, i32
  }
  func.func @transform_1(%arg0: i32, %arg1: i32) -> (i32, i32) {
    %c0_i32 = arith.constant 0 : i32
    %c0_i32_0 = arith.constant 0 : i32
    %c0_i32_1 = arith.constant 0 : i32
    return %c0_i32, %c0_i32_0 : i32, i32
  }
  func.func @transform_2(%arg0: i32, %arg1: i32) -> (i32, i32) {
    %c0_i32 = arith.constant 0 : i32
    %c0_i32_0 = arith.constant 0 : i32
    %c0_i32_1 = arith.constant 0 : i32
    return %c0_i32, %c0_i32_0 : i32, i32
  }
  func.func @transform_3(%arg0: i32, %arg1: i32) -> (i32, i32) {
    %c0_i32 = arith.constant 0 : i32
    %c0_i32_0 = arith.constant 0 : i32
    %c0_i32_1 = arith.constant 0 : i32
    return %c0_i32, %c0_i32_0 : i32, i32
  }
}

</mosaic_0001>

<llo_original>
// kernel: tpu_custom_call.1
$region0: #{tpu_custom_call.1}
  #allocation0 [shape = 'u32[]', space=smem, size = 0x4, offset = 0x4, fixed_abs, tag = 'smem constant byte address 0x4 - core index']
  #allocation1 [shape = 'u32[144,128]{1,0:T(1,128)}', space=vmem, size = 0x12000, scoped, tag = 'internal scratch']
  %s0 = inlined_call_operand.hbm [shape: f32[2,4,29], index: 0, kind: input, shape index: {}]
  %s1 = inlined_call_operand.vmem [shape: f32[4,1], index: 1, kind: output, shape index: {0}]
  %s2 = inlined_call_operand.hbm [shape: f32[4,4], index: 2, kind: output, shape index: {1}]
  %s3 = inlined_call_operand.vmem [shape: f32[4,1], index: 3, kind: output, shape index: {2}]
  %4 = xla_tuple %s1, %s2, %s3
  %s5 = sld [smem:[#allocation0]]
  $region65: #{tpu_custom_call.1} parent=0
    _
  %s7 = ssub.s32 1, %s5
  %s8 = scalar_select 0, %s7, %s5
  $region1: #{tpu_custom_call.1} parent=0
    #allocation2 [shape = 'u8[4096]{0}', space=vmem, size = 0x1000, scoped, tag = 'input window, operand 0']
    #allocation3 [shape = 's32[2]{0}', space=sflag, size = 0x8, scoped, tag = 'scoped memory for tpu_custom_call.1']
    #allocation4 [shape = 's32[2]{0}', space=sflag, size = 0x8, scoped, tag = 'scoped memory for tpu_custom_call.1']
    #allocation5 [shape = 'u8[2048]{0}', space=vmem, size = 0x800, scoped, tag = 'output window, operand 1, single buffered']
    %9 = vsyncpa [#allocation3], 0
    %s10 = scalar_lea.sflag [#allocation3], 1
    %11 = vsyncpa %s10, 0
    %12 = vsyncpa [#allocation4], 0
    loop: start=0, step=1, limit=4
    $region2: #{tpu_custom_call.1} parent=1 // loop_pre_header
      _
    $region3: #{tpu_custom_call.1} parent=1 // loop_header
      %s14 = sphi 0, %s18
      %p15 = scmp.ge.s32.totalorder %s14, 4
      %s21 = sphi 0, %s33
      %s22 = sphi 0, %s29
      %s23 = sphi 0, %s21
      %s24 = sphi 0, %s22
      %s25 = sphi 0, %s23
      %s26 = sphi 0, %s24
      %s38 = sphi 0, %s40
      %s41 = sphi 0, %s38
      %s42 = sphi 0, %s41
      %s58 = sphi 0, %s42
      %s62 = sphi 0, %s62
      %s64 = sphi 0, %s62
      %s65 = sphi 0, %s64
      %s79 = sphi 0, %s65
      %s83 = sphi 0, %s83
      %s85 = sphi 0, %s83
      %s86 = sphi 0, %s85
      %s100 = sphi 0, %s86
      %s104 = sphi 0, %s104
      %s106 = sphi 0, %s104
      %s107 = sphi 0, %s106
      %s121 = sphi 0, %s107
    $region4: #{tpu_custom_call.1} parent=1 // loop_header_branch
      %17 = sbr.rel (%p15) target = $region8
    $region5: #{tpu_custom_call.1} parent=1 // loop_body
      %s19 = ssub.s32 %s14, 1
      %s20 = ssub.s32 %s14, 2
      %s27 = sadd.s32 1, %s22
      %p28 = scmp.ge.s32.totalorder %s27, 1
      %s29 = scalar_select %p28, 0, %s27
      %s30 = sadd.s32 1, %s21
      %s31 = scalar_select %p28, %s30, %s21
      %p32 = scmp.ge.s32.totalorder %s31, 2
      %s33 = scalar_select %p32, 0, %s31
      %s34 = ssub.s32 %s21, %s33
      %s35 = ssub.s32 %s22, %s29
      %s36 = sor.u32 %s34, %s35
      %p37 = scmp.eq.s32.totalorder %s36, 0
      %s39 = sadd.s32 %s38, 1
      %s40 = scalar_select %p37, %s38, %s39
      %p43 = pneg %p37
      %p44 = scmp.eq.s32.totalorder %s14, 1
      %p45 = por %p43, %p44
      %p46 = scmp.ne.s32.totalorder %s38, %s41
      %p47 = scmp.eq.s32.totalorder %s14, 0
      %p48 = por %p46, %p47
      %p49 = scmp.ne.s32.totalorder %s38, %s41
      %p50 = scmp.eq.s32.totalorder %s19, 1
      %p51 = por %p49, %p50
      %p52 = scmp.ne.s32.totalorder %s41, %s42
      %p53 = scmp.eq.s32.totalorder %s19, 0
      %p54 = por %p52, %p53
      %p55 = scmp.ne.s32.totalorder %s41, %s42
      %p56 = scmp.eq.s32.totalorder %s20, 1
      %p57 = por %p55, %p56
      %p59 = scmp.ne.s32.totalorder %s42, %s58
      %p60 = scmp.eq.s32.totalorder %s20, 0
      %p61 = por %p59, %p60
      %s63 = sadd.s32 %s62, 1
      %p66 = scmp.eq.s32.totalorder %s14, 1
      %p67 = scmp.ne.s32.totalorder %s62, %s64
      %p68 = scmp.eq.s32.totalorder %s14, 0
      %p69 = por %p67, %p68
      %p70 = scmp.ne.s32.totalorder %s62, %s64
      %p71 = scmp.eq.s32.totalorder %s19, 1
      %p72 = por %p70, %p71
      %p73 = scmp.ne.s32.totalorder %s64, %s65
      %p74 = scmp.eq.s32.totalorder %s19, 0
      %p75 = por %p73, %p74
      %p76 = scmp.ne.s32.totalorder %s64, %s65
      %p77 = scmp.eq.s32.totalorder %s20, 1
      %p78 = por %p76, %p77
      %p80 = scmp.ne.s32.totalorder %s65, %s79
      %p81 = scmp.eq.s32.totalorder %s20, 0
      %p82 = por %p80, %p81
      %s84 = sadd.s32 %s83, 1
      %p87 = scmp.eq.s32.totalorder %s14, 1
      %p88 = scmp.ne.s32.totalorder %s83, %s85
      %p89 = scmp.eq.s32.totalorder %s14, 0
      %p90 = por %p88, %p89
      %p91 = scmp.ne.s32.totalorder %s83, %s85
      %p92 = scmp.eq.s32.totalorder %s19, 1
      %p93 = por %p91, %p92
      %p94 = scmp.ne.s32.totalorder %s85, %s86
      %p95 = scmp.eq.s32.totalorder %s19, 0
      %p96 = por %p94, %p95
      %p97 = scmp.ne.s32.totalorder %s85, %s86
      %p98 = scmp.eq.s32.totalorder %s20, 1
      %p99 = por %p97, %p98
      %p101 = scmp.ne.s32.totalorder %s86, %s100
      %p102 = scmp.eq.s32.totalorder %s20, 0
      %p103 = por %p101, %p102
      %s105 = sadd.s32 %s104, 1
      %p108 = scmp.eq.s32.totalorder %s14, 1
      %p109 = scmp.ne.s32.totalorder %s104, %s106
      %p110 = scmp.eq.s32.totalorder %s14, 0
      %p111 = por %p109, %p110
      %p112 = scmp.ne.s32.totalorder %s104, %s106
      %p113 = scmp.eq.s32.totalorder %s19, 1
      %p114 = por %p112, %p113
      %p115 = scmp.ne.s32.totalorder %s106, %s107
      %p116 = scmp.eq.s32.totalorder %s19, 0
      %p117 = por %p115, %p116
      %p118 = scmp.ne.s32.totalorder %s106, %s107
      %p119 = scmp.eq.s32.totalorder %s20, 1
      %p120 = por %p118, %p119
      %p122 = scmp.ne.s32.totalorder %s107, %s121
      %p123 = scmp.eq.s32.totalorder %s20, 0
      %p124 = por %p122, %p123
      %p125 = scmp.le.s32.totalorder 1, %s14
      %p126 = scmp.lt.s32.totalorder %s14, 3
      %p127 = pnand %p125, %p126
      %p128 = pneg %p127
      // Predicated region
      $region9: #{tpu_custom_call.1} parent=5 // pred_check
        _
      $region10: #{tpu_custom_call.1} parent=5 // pred_check_branch
        %130 = sbr.rel (%p127) target = $region12
      $region11: #{tpu_custom_call.1} parent=5 // pred_region
        %s131 = ssub.s32 %s14, 1
      $region12: #{tpu_custom_call.1} parent=5 // pred_fallthru
        _
      %p132 = scmp.lt.s32.totalorder %s14, 2
      // Predicated region
      $region13: #{tpu_custom_call.1} parent=5 // pred_check
        %p133 = pneg %p132
      $region14: #{tpu_custom_call.1} parent=5 // pred_check_branch
        %135 = sbr.rel (%p133) target = $region16
      $region15: #{tpu_custom_call.1} parent=5 // pred_region
        // Predicated region
        $region17: #{tpu_custom_call.1} parent=15 // pred_check
          %p136 = pneg %p48
        $region18: #{tpu_custom_call.1} parent=15 // pred_check_branch
          %138 = sbr.rel (%p136) target = $region20
        $region19: #{tpu_custom_call.1} parent=15 // pred_region
          %s139 = sand.u32 %s38, 1
          %s140 = scalar_lea.sflag [#allocation3], %s139
          %s141 = sand.u32 %s38, 1
          %s142 = smul.addr %s141, 4
          %s143 = scalar_lea.vmem [#allocation2], %s142
          %s145 = ssub.s32 64, 64
          %146 = vsyncadd %s140, %s145
          %s147 = sadd.s32 %s22, %s21
          %s148 = smul.addr %s147, 64
          %s149 = scalar_lea.hbm %s0, %s148
          %s151 = sshll.u32 %s143, 4
          %s152 = int_to_ptr.vmem [resolvable:$true] %s151
          %154 = dma.hbm_to_vmem [thread:$0]  %s149, 64, %s152, %s140
        $region20: #{tpu_custom_call.1} parent=15 // pred_fallthru
          _
      $region16: #{tpu_custom_call.1} parent=5 // pred_fallthru
        _
      %p155 = scmp.le.s32.totalorder 1, %s14
      %p156 = scmp.lt.s32.totalorder %s14, 3
      %p157 = pnand %p155, %p156
      %p158 = pneg %p157
      // Predicated region
      $region21: #{tpu_custom_call.1} parent=5 // pred_check
        _
      $region22: #{tpu_custom_call.1} parent=5 // pred_check_branch
        %160 = sbr.rel (%p157) target = $region24
      $region23: #{tpu_custom_call.1} parent=5 // pred_region
        %s161 = ssub.s32 %s14, 1
        %s162 = sand.u32 %s41, 1
        %s163 = scalar_lea.sflag [#allocation3], %s162
        %s164 = sand.u32 %s41, 1
        %s165 = smul.addr %s164, 4
        %s166 = scalar_lea.vmem [#allocation2], %s165
        // Predicated region
        $region25: #{tpu_custom_call.1} parent=23 // pred_check
          %p167 = pneg %p54
        $region26: #{tpu_custom_call.1} parent=23 // pred_check_branch
          %169 = sbr.rel (%p167) target = $region28
        $region27: #{tpu_custom_call.1} parent=23 // pred_region
          %170 = dma.done %s163, 64
        $region28: #{tpu_custom_call.1} parent=23 // pred_fallthru
          _
        %s171 = sand.u32 %s41, 1
        %s172 = scalar_lea.sflag [#allocation3], %s171
        %s173 = sand.u32 %s41, 1
        %s174 = smul.addr %s173, 4
        %s175 = scalar_lea.vmem [#allocation2], %s174
        %p176 = pneg %p54
        %p177 = pneg %p51
        %p178 = pneg %p75
        %p179 = pneg %p72
        %p180 = pneg %p96
        %p181 = pneg %p93
        %p182 = pneg %p117
        %p183 = pneg %p114
        %p184 = scmp.eq.s32.totalorder %s23, 0
        %p185 = scmp.eq.s32.totalorder %s24, 0
        %p186 = pnand %p184, %p185
        %p187 = pneg %p186
        // Predicated region
        $region29: #{tpu_custom_call.1} parent=23 // pred_check
          _
        $region30: #{tpu_custom_call.1} parent=23 // pred_check_branch
          %189 = sbr.rel (%p186) target = $region32
        $region31: #{tpu_custom_call.1} parent=23 // pred_region
          %vm190 = vcmask 3072
          %191 = vst.msk [vmem:[%s1] sm:$0xf] %vm190, 0.0
          %vm192 = vcmask 27648
          %193 = vst.msk [vmem:[#allocation5] sm:$0xf] %vm192, 0.0
        $region32: #{tpu_custom_call.1} parent=23 // pred_fallthru
          _
        %v194 = vld [vmem:[%s166] sm:$0xf]
        %v195 = vld [vmem:[%s1] sm:$0xf]
        %vm196 = vcmask 232448
        %v197 = vsel %vm196, %v194, 0.0
        %198 = vadd.xlane.f32.xlu0 %v197
        %v199 = vpop.xlane.xlu0 %198
        %v200 = vadd.f32 %v195, %v199
        %vm201 = vcmask 3072
        %202 = vst.msk [vmem:[%s1] sm:$0xf] %vm201, %v200
        %v203 = vld [vmem:[#allocation5] sm:$0xf]
        %vm204 = vcmask 236544
        %v206 = vsel %vm204, %v194, 0
        %208 = vmatprep.subr.mxu0 0.0
        %209 = vmatpush1.xpose.msra.mxu0 %v206
        %210 = vmatprep.subr.mxu0 0.0
        %211 = vmatpush1.xpose.msra.mxu0 0.0
        %212 = vmatprep.subr.mxu0 0.0
        %213 = vmatpush1.xpose.msra.mxu0 0.0
        %214 = vmatprep.subr.mxu0 0.0
        %215 = vmatpush1.xpose.msra.mxu0 0.0
        %216 = vmatprep.subr.mxu0 0.0
        %217 = vmatpush1.xpose.msra.mxu0 0.0
        %218 = vmatprep.subr.mxu0 0.0
        %219 = vmatpush1.xpose.msra.mxu0 0.0
        %220 = vmatprep.subr.mxu0 0.0
        %221 = vmatpush1.xpose.msra.mxu0 0.0
        %222 = vmatprep.subr.mxu0 0.0
        %223 = vmatpush1.xpose.msra.mxu0 0.0
        %224 = vmatprep.subr.mxu0 0.0
        %225 = vmatpush1.xpose.msra.mxu0 0.0
        %226 = vmatprep.subr.mxu0 0.0
        %227 = vmatpush1.xpose.msra.mxu0 0.0
        %228 = vmatprep.subr.mxu0 0.0
        %229 = vmatpush1.xpose.msra.mxu0 0.0
        %230 = vmatprep.subr.mxu0 0.0
        %231 = vmatpush1.xpose.msra.mxu0 0.0
        %232 = vmatprep.subr.mxu0 0.0
        %233 = vmatpush1.xpose.msra.mxu0 0.0
        %234 = vmatprep.subr.mxu0 0.0
        %235 = vmatpush1.xpose.msra.mxu0 0.0
        %236 = vmatprep.subr.mxu0 0.0
        %237 = vmatpush1.xpose.msra.mxu0 0.0
        %238 = vmatprep.subr.mxu0 0.0
        %239 = vmatpush1.xpose.msra.mxu0 0.0
        %240 = vmatprep.subr.mxu0 0.0
        %241 = vmatpush1.xpose.msra.mxu0 0.0
        %242 = vmatprep.subr.mxu0 0.0
        %243 = vmatpush1.xpose.msra.mxu0 0.0
        %244 = vmatprep.subr.mxu0 0.0
        %245 = vmatpush1.xpose.msra.mxu0 0.0
        %246 = vmatprep.subr.mxu0 0.0
        %247 = vmatpush1.xpose.msra.mxu0 0.0
        %248 = vmatprep.subr.mxu0 0.0
        %249 = vmatpush1.xpose.msra.mxu0 0.0
        %250 = vmatprep.subr.mxu0 0.0
        %251 = vmatpush1.xpose.msra.mxu0 0.0
        %252 = vmatprep.subr.mxu0 0.0
        %253 = vmatpush1.xpose.msra.mxu0 0.0
        %254 = vmatprep.subr.mxu0 0.0
        %255 = vmatpush1.xpose.msra.mxu0 0.0
        %256 = vmatprep.subr.mxu0 0.0
        %257 = vmatpush1.xpose.msra.mxu0 0.0
        %258 = vmatprep.subr.mxu0 0.0
        %259 = vmatpush1.xpose.msra.mxu0 0.0
        %260 = vmatprep.subr.mxu0 0.0
        %261 = vmatpush1.xpose.msra.mxu0 0.0
        %262 = vmatprep.subr.mxu0 0.0
        %263 = vmatpush1.xpose.msra.mxu0 0.0
        %264 = vmatprep.subr.mxu0 0.0
        %265 = vmatpush1.xpose.msra.mxu0 0.0
        %266 = vmatprep.subr.mxu0 0.0
        %267 = vmatpush1.xpose.msra.mxu0 0.0
        %268 = vmatprep.subr.mxu0 0.0
        %269 = vmatpush1.xpose.msra.mxu0 0.0
        %270 = vmatprep.subr.mxu0 0.0
        %271 = vmatpush1.xpose.msra.mxu0 0.0
        %272 = vmatprep.mubr.f32.mxu0 0.0
        %273 = vmatmul.mubr.f32.gmra.mrb[0].mxu0 %v206
        %v274 = vpop.f32.mrb[0].mxu0
        %v275 = vadd.f32 0.0, %v274
        %v276 = vpop.f32.mrb[0].mxu0
        %277 = vdwg.mxu0
        %v278 = vadd.f32 %v203, %v275
        %vm279 = vcmask 27648
        %280 = vst.msk [vmem:[#allocation5] sm:$0xf] %vm279, %v278
        %p281 = scmp.eq.s32.totalorder %s23, 1
        %p282 = pnand %p281, %p185
        %p283 = pneg %p282
        // Predicated region
        $region33: #{tpu_custom_call.1} parent=23 // pred_check
          _
        $region34: #{tpu_custom_call.1} parent=23 // pred_check_branch
          %285 = sbr.rel (%p282) target = $region36
        $region35: #{tpu_custom_call.1} parent=23 // pred_region
          %v286 = vlaneseq
          %v287 = vshrl.u32 %v286, 7
          %v288 = vlaneseq
          %v289 = vand.u32 %v288, 127
          %vm290 = vcmp.eq.s32.totalorder %v287, %v289
          %v291 = vsel %vm290, 1, 0
          %v292 = vcvt.s32.f32 %v291
          %v293 = vld [vmem:[%s1] sm:$0xf]
          %v294 = vrcp.pop 58.0
          %v295 = vmul.f32 %v293, %v294
          %v296 = vld [vmem:[#allocation5] sm:$0xf]
          %v297 = vmul.f32 %v296, %v294
          %v298 = vmul.f32 %v292, 0.01
          %v299 = vadd.f32 %v297, %v298
          %v300 = vmul.f32 %v299, %v299
          %v301 = vsel %vm279, %v300, 0.0
          %302 = vadd.xlane.f32.xlu0 %v301
          %v303 = vpop.xlane.xlu0 %302
          %v304 = vrot.slane %v303, 4
          %v305 = vadd.f32 %v303, %v304
          %v306 = vrot.slane %v305, 2
          %v307 = vadd.f32 %v305, %v306
          %v308 = vrot.slane %v307, 1
          %v309 = vadd.f32 %v307, %v308
          %s310 = vtos %v309
          %v311 = vstv %s310
          %v312 = vrsqrt.pop %v311
          %v313 = vmul.f32 %v311, %v312
          %vm314 = vcmp.eq.f32.partialorder %v311, inf
          %v315 = vsel %vm314, %v311, %v313
          %vm316 = vcmp.eq.f32.partialorder %v311, 0.0
          %v317 = vand.u32 %v311, 2147483648
          %v318 = vsel %vm316, %v317, %v315
          %s319 = vtos %v318
          %v320 = vstv %s319
          %v321 = vrcp.pop %v320
          %v322 = vmul.f32 %v299, %v321
          %v323 = vmul.f32 %v292, 3.0
          %vm324 = vcmask 31744
          %v326 = vsel %vm324, %v292, 0
          %vm328 = vcmask 1043456
          %v330 = vsel %vm328, %v322, 0
          %332 = vmatprep.subr.mxu0 0.0
          %333 = vmatpush1.msra.mxu0 %v330
          %334 = vmatprep.subr.mxu0 0.0
          %335 = vmatpush1.msra.mxu0 0.0
          %336 = vmatprep.subr.mxu0 0.0
          %337 = vmatpush1.msra.mxu0 0.0
          %338 = vmatprep.subr.mxu0 0.0
          %339 = vmatpush1.msra.mxu0 0.0
          %340 = vmatprep.subr.mxu0 0.0
          %341 = vmatpush1.msra.mxu0 0.0
          %342 = vmatprep.subr.mxu0 0.0
          %343 = vmatpush1.msra.mxu0 0.0
          %344 = vmatprep.subr.mxu0 0.0
          %345 = vmatpush1.msra.mxu0 0.0
          %346 = vmatprep.subr.mxu0 0.0
          %347 = vmatpush1.msra.mxu0 0.0
          %348 = vmatprep.subr.mxu0 0.0
          %349 = vmatpush1.msra.mxu0 0.0
          %350 = vmatprep.subr.mxu0 0.0
          %351 = vmatpush1.msra.mxu0 0.0
          %352 = vmatprep.subr.mxu0 0.0
          %353 = vmatpush1.msra.mxu0 0.0
          %354 = vmatprep.subr.mxu0 0.0
          %355 = vmatpush1.msra.mxu0 0.0
          %356 = vmatprep.subr.mxu0 0.0
          %357 = vmatpush1.msra.mxu0 0.0
          %358 = vmatprep.subr.mxu0 0.0
          %359 = vmatpush1.msra.mxu0 0.0
          %360 = vmatprep.subr.mxu0 0.0
          %361 = vmatpush1.msra.mxu0 0.0
          %362 = vmatprep.subr.mxu0 0.0
          %363 = vmatpush1.msra.mxu0 0.0
          %364 = vmatprep.subr.mxu0 0.0
          %365 = vmatpush1.msra.mxu0 0.0
          %366 = vmatprep.subr.mxu0 0.0
          %367 = vmatpush1.msra.mxu0 0.0
          %368 = vmatprep.subr.mxu0 0.0
          %369 = vmatpush1.msra.mxu0 0.0
          %370 = vmatprep.subr.mxu0 0.0
          %371 = vmatpush1.msra.mxu0 0.0
          %372 = vmatprep.subr.mxu0 0.0
          %373 = vmatpush1.msra.mxu0 0.0
          %374 = vmatprep.subr.mxu0 0.0
          %375 = vmatpush1.msra.mxu0 0.0
          %376 = vmatprep.subr.mxu0 0.0
          %377 = vmatpush1.msra.mxu0 0.0
          %378 = vmatprep.subr.mxu0 0.0
          %379 = vmatpush1.msra.mxu0 0.0
          %380 = vmatprep.subr.mxu0 0.0
          %381 = vmatpush1.msra.mxu0 0.0
          %382 = vmatprep.subr.mxu0 0.0
          %383 = vmatpush1.msra.mxu0 0.0
          %384 = vmatprep.subr.mxu0 0.0
          %385 = vmatpush1.msra.mxu0 0.0
          %386 = vmatprep.subr.mxu0 0.0
          %387 = vmatpush1.msra.mxu0 0.0
          %388 = vmatprep.subr.mxu0 0.0
          %389 = vmatpush1.msra.mxu0 0.0
          %390 = vmatprep.subr.mxu0 0.0
          %391 = vmatpush1.msra.mxu0 0.0
          %392 = vmatprep.subr.mxu0 0.0
          %393 = vmatpush1.msra.mxu0 0.0
          %394 = vmatprep.subr.mxu0 0.0
          %395 = vmatpush1.msra.mxu0 0.0
          %396 = vmatprep.mubr.f32.mxu0 0.0
          %397 = vmatmul.mubr.f32.gmra.mrb[0].mxu0 %v326
          %v398 = vpop.f32.mrb[0].mxu0
          %v399 = vadd.f32 0.0, %v398
          %v400 = vpop.f32.mrb[0].mxu0
          %401 = vdwg.mxu0
          %v402 = vsub.f32 %v323, %v399
          %v403 = vmul.f32 %v402, 0.5
          %v404 = vsel %vm324, %v322, 0
          %v407 = vsel %vm328, %v403, 0
          %409 = vmatprep.subr.mxu0 0.0
          %410 = vmatpush1.msra.mxu0 %v407
          %411 = vmatprep.subr.mxu0 0.0
          %412 = vmatpush1.msra.mxu0 0.0
          %413 = vmatprep.subr.mxu0 0.0
          %414 = vmatpush1.msra.mxu0 0.0
          %415 = vmatprep.subr.mxu0 0.0
          %416 = vmatpush1.msra.mxu0 0.0
          %417 = vmatprep.subr.mxu0 0.0
          %418 = vmatpush1.msra.mxu0 0.0
          %419 = vmatprep.subr.mxu0 0.0
          %420 = vmatpush1.msra.mxu0 0.0
          %421 = vmatprep.subr.mxu0 0.0
          %422 = vmatpush1.msra.mxu0 0.0
          %423 = vmatprep.subr.mxu0 0.0
          %424 = vmatpush1.msra.mxu0 0.0
          %425 = vmatprep.subr.mxu0 0.0
          %426 = vmatpush1.msra.mxu0 0.0
          %427 = vmatprep.subr.mxu0 0.0
          %428 = vmatpush1.msra.mxu0 0.0
          %429 = vmatprep.subr.mxu0 0.0
          %430 = vmatpush1.msra.mxu0 0.0
          %431 = vmatprep.subr.mxu0 0.0
          %432 = vmatpush1.msra.mxu0 0.0
          %433 = vmatprep.subr.mxu0 0.0
          %434 = vmatpush1.msra.mxu0 0.0
          %435 = vmatprep.subr.mxu0 0.0
          %436 = vmatpush1.msra.mxu0 0.0
          %437 = vmatprep.subr.mxu0 0.0
          %438 = vmatpush1.msra.mxu0 0.0
          %439 = vmatprep.subr.mxu0 0.0
          %440 = vmatpush1.msra.mxu0 0.0
          %441 = vmatprep.subr.mxu0 0.0
          %442 = vmatpush1.msra.mxu0 0.0
          %443 = vmatprep.subr.mxu0 0.0
          %444 = vmatpush1.msra.mxu0 0.0
          %445 = vmatprep.subr.mxu0 0.0
          %446 = vmatpush1.msra.mxu0 0.0
          %447 = vmatprep.subr.mxu0 0.0
          %448 = vmatpush1.msra.mxu0 0.0
          %449 = vmatprep.subr.mxu0 0.0
          %450 = vmatpush1.msra.mxu0 0.0
          %451 = vmatprep.subr.mxu0 0.0
          %452 = vmatpush1.msra.mxu0 0.0
          %453 = vmatprep.subr.mxu0 0.0
          %454 = vmatpush1.msra.mxu0 0.0
          %455 = vmatprep.subr.mxu0 0.0
          %456 = vmatpush1.msra.mxu0 0.0
          %457 = vmatprep.subr.mxu0 0.0
          %458 = vmatpush1.msra.mxu0 0.0
          %459 = vmatprep.subr.mxu0 0.0
          %460 = vmatpush1.msra.mxu0 0.0
          %461 = vmatprep.subr.mxu0 0.0
          %462 = vmatpush1.msra.mxu0 0.0
          %463 = vmatprep.subr.mxu0 0.0
          %464 = vmatpush1.msra.mxu0 0.0
          %465 = vmatprep.subr.mxu0 0.0
          %466 = vmatpush1.msra.mxu0 0.0
          %467 = vmatprep.subr.mxu0 0.0
          %468 = vmatpush1.msra.mxu0 0.0
          %469 = vmatprep.subr.mxu0 0.0
          %470 = vmatpush1.msra.mxu0 0.0
          %471 = vmatprep.subr.mxu0 0.0
          %472 = vmatpush1.msra.mxu0 0.0
          %473 = vmatprep.mubr.f32.mxu0 0.0
          %474 = vmatmul.mubr.f32.gmra.mrb[0].mxu0 %v404
          %v475 = vpop.f32.mrb[0].mxu0
          %v476 = vadd.f32 0.0, %v475
          %v477 = vpop.f32.mrb[0].mxu0
          %478 = vdwg.mxu0
          %v479 = vsel %vm324, %v403, 0
          %v481 = vsel %vm328, %v292, 0
          %483 = vmatprep.subr.mxu0 0.0
          %484 = vmatpush1.msra.mxu0 %v481
          %485 = vmatprep.subr.mxu0 0.0
          %486 = vmatpush1.msra.mxu0 0.0
          %487 = vmatprep.subr.mxu0 0.0
          %488 = vmatpush1.msra.mxu0 0.0
          %489 = vmatprep.subr.mxu0 0.0
          %490 = vmatpush1.msra.mxu0 0.0
          %491 = vmatprep.subr.mxu0 0.0
          %492 = vmatpush1.msra.mxu0 0.0
          %493 = vmatprep.subr.mxu0 0.0
          %494 = vmatpush1.msra.mxu0 0.0
          %495 = vmatprep.subr.mxu0 0.0
          %496 = vmatpush1.msra.mxu0 0.0
          %497 = vmatprep.subr.mxu0 0.0
          %498 = vmatpush1.msra.mxu0 0.0
          %499 = vmatprep.subr.mxu0 0.0
          %500 = vmatpush1.msra.mxu0 0.0
          %501 = vmatprep.subr.mxu0 0.0
          %502 = vmatpush1.msra.mxu0 0.0
          %503 = vmatprep.subr.mxu0 0.0
          %504 = vmatpush1.msra.mxu0 0.0
          %505 = vmatprep.subr.mxu0 0.0
          %506 = vmatpush1.msra.mxu0 0.0
          %507 = vmatprep.subr.mxu0 0.0
          %508 = vmatpush1.msra.mxu0 0.0
          %509 = vmatprep.subr.mxu0 0.0
          %510 = vmatpush1.msra.mxu0 0.0
          %511 = vmatprep.subr.mxu0 0.0
          %512 = vmatpush1.msra.mxu0 0.0
          %513 = vmatprep.subr.mxu0 0.0
          %514 = vmatpush1.msra.mxu0 0.0
          %515 = vmatprep.subr.mxu0 0.0
          %516 = vmatpush1.msra.mxu0 0.0
          %517 = vmatprep.subr.mxu0 0.0
          %518 = vmatpush1.msra.mxu0 0.0
          %519 = vmatprep.subr.mxu0 0.0
          %520 = vmatpush1.msra.mxu0 0.0
          %521 = vmatprep.subr.mxu0 0.0
          %522 = vmatpush1.msra.mxu0 0.0
          %523 = vmatprep.subr.mxu0 0.0
          %524 = vmatpush1.msra.mxu0 0.0
          %525 = vmatprep.subr.mxu0 0.0
          %526 = vmatpush1.msra.mxu0 0.0
          %527 = vmatprep.subr.mxu0 0.0
          %528 = vmatpush1.msra.mxu0 0.0
          %529 = vmatprep.subr.mxu0 0.0
          %530 = vmatpush1.msra.mxu0 0.0
          %531 = vmatprep.subr.mxu0 0.0
          %532 = vmatpush1.msra.mxu0 0.0
          %533 = vmatprep.subr.mxu0 0.0
          %534 = vmatpush1.msra.mxu0 0.0
          %535 = vmatprep.subr.mxu0 0.0
          %536 = vmatpush1.msra.mxu0 0.0
          %537 = vmatprep.subr.mxu0 0.0
          %538 = vmatpush1.msra.mxu0 0.0
          %539 = vmatprep.subr.mxu0 0.0
          %540 = vmatpush1.msra.mxu0 0.0
          %541 = vmatprep.subr.mxu0 0.0
          %542 = vmatpush1.msra.mxu0 0.0
          %543 = vmatprep.subr.mxu0 0.0
          %544 = vmatpush1.msra.mxu0 0.0
          %545 = vmatprep.subr.mxu0 0.0
          %546 = vmatpush1.msra.mxu0 0.0
          %547 = vmatprep.mubr.f32.mxu0 0.0
          %548 = vmatmul.mubr.f32.gmra.mrb[0].mxu0 %v479
          %v549 = vpop.f32.mrb[0].mxu0
          %v550 = vadd.f32 0.0, %v549
          %v551 = vpop.f32.mrb[0].mxu0
          %552 = vdwg.mxu0
          %v554 = vsel %vm324, %v550, 0
          %v557 = vsel %vm328, %v476, 0
          %559 = vmatprep.subr.mxu0 0.0
          %560 = vmatpush1.msra.mxu0 %v557
          %561 = vmatprep.subr.mxu0 0.0
          %562 = vmatpush1.msra.mxu0 0.0
          %563 = vmatprep.subr.mxu0 0.0
          %564 = vmatpush1.msra.mxu0 0.0
          %565 = vmatprep.subr.mxu0 0.0
          %566 = vmatpush1.msra.mxu0 0.0
          %567 = vmatprep.subr.mxu0 0.0
          %568 = vmatpush1.msra.mxu0 0.0
          %569 = vmatprep.subr.mxu0 0.0
          %570 = vmatpush1.msra.mxu0 0.0
          %571 = vmatprep.subr.mxu0 0.0
          %572 = vmatpush1.msra.mxu0 0.0
          %573 = vmatprep.subr.mxu0 0.0
          %574 = vmatpush1.msra.mxu0 0.0
          %575 = vmatprep.subr.mxu0 0.0
          %576 = vmatpush1.msra.mxu0 0.0
          %577 = vmatprep.subr.mxu0 0.0
          %578 = vmatpush1.msra.mxu0 0.0
          %579 = vmatprep.subr.mxu0 0.0
          %580 = vmatpush1.msra.mxu0 0.0
          %581 = vmatprep.subr.mxu0 0.0
          %582 = vmatpush1.msra.mxu0 0.0
          %583 = vmatprep.subr.mxu0 0.0
          %584 = vmatpush1.msra.mxu0 0.0
          %585 = vmatprep.subr.mxu0 0.0
          %586 = vmatpush1.msra.mxu0 0.0
          %587 = vmatprep.subr.mxu0 0.0
          %588 = vmatpush1.msra.mxu0 0.0
          %589 = vmatprep.subr.mxu0 0.0
          %590 = vmatpush1.msra.mxu0 0.0
          %591 = vmatprep.subr.mxu0 0.0
          %592 = vmatpush1.msra.mxu0 0.0
          %593 = vmatprep.subr.mxu0 0.0
          %594 = vmatpush1.msra.mxu0 0.0
          %595 = vmatprep.subr.mxu0 0.0
          %596 = vmatpush1.msra.mxu0 0.0
          %597 = vmatprep.subr.mxu0 0.0
          %598 = vmatpush1.msra.mxu0 0.0
          %599 = vmatprep.subr.mxu0 0.0
          %600 = vmatpush1.msra.mxu0 0.0
          %601 = vmatprep.subr.mxu0 0.0
          %602 = vmatpush1.msra.mxu0 0.0
          %603 = vmatprep.subr.mxu0 0.0
          %604 = vmatpush1.msra.mxu0 0.0
          %605 = vmatprep.subr.mxu0 0.0
          %606 = vmatpush1.msra.mxu0 0.0
          %607 = vmatprep.subr.mxu0 0.0
          %608 = vmatpush1.msra.mxu0 0.0
          %609 = vmatprep.subr.mxu0 0.0
          %610 = vmatpush1.msra.mxu0 0.0
          %611 = vmatprep.subr.mxu0 0.0
          %612 = vmatpush1.msra.mxu0 0.0
          %613 = vmatprep.subr.mxu0 0.0
          %614 = vmatpush1.msra.mxu0 0.0
          %615 = vmatprep.subr.mxu0 0.0
          %616 = vmatpush1.msra.mxu0 0.0
          %617 = vmatprep.subr.mxu0 0.0
          %618 = vmatpush1.msra.mxu0 0.0
          %619 = vmatprep.subr.mxu0 0.0
          %620 = vmatpush1.msra.mxu0 0.0
          %621 = vmatprep.subr.mxu0 0.0
          %622 = vmatpush1.msra.mxu0 0.0
          %623 = vmatprep.mubr.f32.mxu0 0.0
          %624 = vmatmul.mubr.f32.gmra.mrb[0].mxu0 %v554
          %v625 = vpop.f32.mrb[0].mxu0
          %v626 = vadd.f32 0.0, %v625
          %v627 = vpop.f32.mrb[0].mxu0
          %628 = vdwg.mxu0
          %v629 = vsub.f32 %v323, %v626
          %v630 = vmul.f32 %v629, 0.5
          %v631 = vsel %vm324, %v476, 0
          %v634 = vsel %vm328, %v630, 0
          %636 = vmatprep.subr.mxu0 0.0
          %637 = vmatpush1.msra.mxu0 %v634
          %638 = vmatprep.subr.mxu0 0.0
          %639 = vmatpush1.msra.mxu0 0.0
          %640 = vmatprep.subr.mxu0 0.0
          %641 = vmatpush1.msra.mxu0 0.0
          %642 = vmatprep.subr.mxu0 0.0
          %643 = vmatpush1.msra.mxu0 0.0
          %644 = vmatprep.subr.mxu0 0.0
          %645 = vmatpush1.msra.mxu0 0.0
          %646 = vmatprep.subr.mxu0 0.0
          %647 = vmatpush1.msra.mxu0 0.0
          %648 = vmatprep.subr.mxu0 0.0
          %649 = vmatpush1.msra.mxu0 0.0
          %650 = vmatprep.subr.mxu0 0.0
          %651 = vmatpush1.msra.mxu0 0.0
          %652 = vmatprep.subr.mxu0 0.0
          %653 = vmatpush1.msra.mxu0 0.0
          %654 = vmatprep.subr.mxu0 0.0
          %655 = vmatpush1.msra.mxu0 0.0
          %656 = vmatprep.subr.mxu0 0.0
          %657 = vmatpush1.msra.mxu0 0.0
          %658 = vmatprep.subr.mxu0 0.0
          %659 = vmatpush1.msra.mxu0 0.0
          %660 = vmatprep.subr.mxu0 0.0
          %661 = vmatpush1.msra.mxu0 0.0
          %662 = vmatprep.subr.mxu0 0.0
          %663 = vmatpush1.msra.mxu0 0.0
          %664 = vmatprep.subr.mxu0 0.0
          %665 = vmatpush1.msra.mxu0 0.0
          %666 = vmatprep.subr.mxu0 0.0
          %667 = vmatpush1.msra.mxu0 0.0
          %668 = vmatprep.subr.mxu0 0.0
          %669 = vmatpush1.msra.mxu0 0.0
          %670 = vmatprep.subr.mxu0 0.0
          %671 = vmatpush1.msra.mxu0 0.0
          %672 = vmatprep.subr.mxu0 0.0
          %673 = vmatpush1.msra.mxu0 0.0
          %674 = vmatprep.subr.mxu0 0.0
          %675 = vmatpush1.msra.mxu0 0.0
          %676 = vmatprep.subr.mxu0 0.0
          %677 = vmatpush1.msra.mxu0 0.0
          %678 = vmatprep.subr.mxu0 0.0
          %679 = vmatpush1.msra.mxu0 0.0
          %680 = vmatprep.subr.mxu0 0.0
          %681 = vmatpush1.msra.mxu0 0.0
          %682 = vmatprep.subr.mxu0 0.0
          %683 = vmatpush1.msra.mxu0 0.0
          %684 = vmatprep.subr.mxu0 0.0
          %685 = vmatpush1.msra.mxu0 0.0
          %686 = vmatprep.subr.mxu0 0.0
          %687 = vmatpush1.msra.mxu0 0.0
          %688 = vmatprep.subr.mxu0 0.0
          %689 = vmatpush1.msra.mxu0 0.0
          %690 = vmatprep.subr.mxu0 0.0
          %691 = vmatpush1.msra.mxu0 0.0
          %692 = vmatprep.subr.mxu0 0.0
          %693 = vmatpush1.msra.mxu0 0.0
          %694 = vmatprep.subr.mxu0 0.0
          %695 = vmatpush1.msra.mxu0 0.0
          %696 = vmatprep.subr.mxu0 0.0
          %697 = vmatpush1.msra.mxu0 0.0
          %698 = vmatprep.subr.mxu0 0.0
          %699 = vmatpush1.msra.mxu0 0.0
          %700 = vmatprep.mubr.f32.mxu0 0.0
          %701 = vmatmul.mubr.f32.gmra.mrb[0].mxu0 %v631
          %v702 = vpop.f32.mrb[0].mxu0
          %v703 = vadd.f32 0.0, %v702
          %v704 = vpop.f32.mrb[0].mxu0
          %705 = vdwg.mxu0
          %v706 = vsel %vm324, %v630, 0
          %v708 = vsel %vm328, %v550, 0
          %710 = vmatprep.subr.mxu0 0.0
          %711 = vmatpush1.msra.mxu0 %v708
          %712 = vmatprep.subr.mxu0 0.0
          %713 = vmatpush1.msra.mxu0 0.0
          %714 = vmatprep.subr.mxu0 0.0
          %715 = vmatpush1.msra.mxu0 0.0
          %716 = vmatprep.subr.mxu0 0.0
          %717 = vmatpush1.msra.mxu0 0.0
          %718 = vmatprep.subr.mxu0 0.0
          %719 = vmatpush1.msra.mxu0 0.0
          %720 = vmatprep.subr.mxu0 0.0
          %721 = vmatpush1.msra.mxu0 0.0
          %722 = vmatprep.subr.mxu0 0.0
          %723 = vmatpush1.msra.mxu0 0.0
          %724 = vmatprep.subr.mxu0 0.0
          %725 = vmatpush1.msra.mxu0 0.0
          %726 = vmatprep.subr.mxu0 0.0
          %727 = vmatpush1.msra.mxu0 0.0
          %728 = vmatprep.subr.mxu0 0.0
          %729 = vmatpush1.msra.mxu0 0.0
          %730 = vmatprep.subr.mxu0 0.0
          %731 = vmatpush1.msra.mxu0 0.0
          %732 = vmatprep.subr.mxu0 0.0
          %733 = vmatpush1.msra.mxu0 0.0
          %734 = vmatprep.subr.mxu0 0.0
          %735 = vmatpush1.msra.mxu0 0.0
          %736 = vmatprep.subr.mxu0 0.0
          %737 = vmatpush1.msra.mxu0 0.0
          %738 = vmatprep.subr.mxu0 0.0
          %739 = vmatpush1.msra.mxu0 0.0
          %740 = vmatprep.subr.mxu0 0.0
          %741 = vmatpush1.msra.mxu0 0.0
          %742 = vmatprep.subr.mxu0 0.0
          %743 = vmatpush1.msra.mxu0 0.0
          %744 = vmatprep.subr.mxu0 0.0
          %745 = vmatpush1.msra.mxu0 0.0
          %746 = vmatprep.subr.mxu0 0.0
          %747 = vmatpush1.msra.mxu0 0.0
          %748 = vmatprep.subr.mxu0 0.0
          %749 = vmatpush1.msra.mxu0 0.0
          %750 = vmatprep.subr.mxu0 0.0
          %751 = vmatpush1.msra.mxu0 0.0
          %752 = vmatprep.subr.mxu0 0.0
          %753 = vmatpush1.msra.mxu0 0.0
          %754 = vmatprep.subr.mxu0 0.0
          %755 = vmatpush1.msra.mxu0 0.0
          %756 = vmatprep.subr.mxu0 0.0
          %757 = vmatpush1.msra.mxu0 0.0
          %758 = vmatprep.subr.mxu0 0.0
          %759 = vmatpush1.msra.mxu0 0.0
          %760 = vmatprep.subr.mxu0 0.0
          %761 = vmatpush1.msra.mxu0 0.0
          %762 = vmatprep.subr.mxu0 0.0
          %763 = vmatpush1.msra.mxu0 0.0
          %764 = vmatprep.subr.mxu0 0.0
          %765 = vmatpush1.msra.mxu0 0.0
          %766 = vmatprep.subr.mxu0 0.0
          %767 = vmatpush1.msra.mxu0 0.0
          %768 = vmatprep.subr.mxu0 0.0
          %769 = vmatpush1.msra.mxu0 0.0
          %770 = vmatprep.subr.mxu0 0.0
          %771 = vmatpush1.msra.mxu0 0.0
          %772 = vmatprep.subr.mxu0 0.0
          %773 = vmatpush1.msra.mxu0 0.0
          %774 = vmatprep.mubr.f32.mxu0 0.0
          %775 = vmatmul.mubr.f32.gmra.mrb[0].mxu0 %v706
          %v776 = vpop.f32.mrb[0].mxu0
          %v777 = vadd.f32 0.0, %v776
          %v778 = vpop.f32.mrb[0].mxu0
          %779 = vdwg.mxu0
          %v781 = vsel %vm324, %v777, 0
          %v784 = vsel %vm328, %v703, 0
          %786 = vmatprep.subr.mxu0 0.0
          %787 = vmatpush1.msra.mxu0 %v784
          %788 = vmatprep.subr.mxu0 0.0
          %789 = vmatpush1.msra.mxu0 0.0
          %790 = vmatprep.subr.mxu0 0.0
          %791 = vmatpush1.msra.mxu0 0.0
          %792 = vmatprep.subr.mxu0 0.0
          %793 = vmatpush1.msra.mxu0 0.0
          %794 = vmatprep.subr.mxu0 0.0
          %795 = vmatpush1.msra.mxu0 0.0
          %796 = vmatprep.subr.mxu0 0.0
          %797 = vmatpush1.msra.mxu0 0.0
          %798 = vmatprep.subr.mxu0 0.0
          %799 = vmatpush1.msra.mxu0 0.0
          %800 = vmatprep.subr.mxu0 0.0
          %801 = vmatpush1.msra.mxu0 0.0
          %802 = vmatprep.subr.mxu0 0.0
          %803 = vmatpush1.msra.mxu0 0.0
          %804 = vmatprep.subr.mxu0 0.0
          %805 = vmatpush1.msra.mxu0 0.0
          %806 = vmatprep.subr.mxu0 0.0
          %807 = vmatpush1.msra.mxu0 0.0
          %808 = vmatprep.subr.mxu0 0.0
          %809 = vmatpush1.msra.mxu0 0.0
          %810 = vmatprep.subr.mxu0 0.0
          %811 = vmatpush1.msra.mxu0 0.0
          %812 = vmatprep.subr.mxu0 0.0
          %813 = vmatpush1.msra.mxu0 0.0
          %814 = vmatprep.subr.mxu0 0.0
          %815 = vmatpush1.msra.mxu0 0.0
          %816 = vmatprep.subr.mxu0 0.0
          %817 = vmatpush1.msra.mxu0 0.0
          %818 = vmatprep.subr.mxu0 0.0
          %819 = vmatpush1.msra.mxu0 0.0
          %820 = vmatprep.subr.mxu0 0.0
          %821 = vmatpush1.msra.mxu0 0.0
          %822 = vmatprep.subr.mxu0 0.0
          %823 = vmatpush1.msra.mxu0 0.0
          %824 = vmatprep.subr.mxu0 0.0
          %825 = vmatpush1.msra.mxu0 0.0
          %826 = vmatprep.subr.mxu0 0.0
          %827 = vmatpush1.msra.mxu0 0.0
          %828 = vmatprep.subr.mxu0 0.0
          %829 = vmatpush1.msra.mxu0 0.0
          %830 = vmatprep.subr.mxu0 0.0
          %831 = vmatpush1.msra.mxu0 0.0
          %832 = vmatprep.subr.mxu0 0.0
          %833 = vmatpush1.msra.mxu0 0.0
          %834 = vmatprep.subr.mxu0 0.0
          %835 = vmatpush1.msra.mxu0 0.0
          %836 = vmatprep.subr.mxu0 0.0
          %837 = vmatpush1.msra.mxu0 0.0
          %838 = vmatprep.subr.mxu0 0.0
          %839 = vmatpush1.msra.mxu0 0.0
          %840 = vmatprep.subr.mxu0 0.0
          %841 = vmatpush1.msra.mxu0 0.0
          %842 = vmatprep.subr.mxu0 0.0
          %843 = vmatpush1.msra.mxu0 0.0
          %844 = vmatprep.subr.mxu0 0.0
          %845 = vmatpush1.msra.mxu0 0.0
          %846 = vmatprep.subr.mxu0 0.0
          %847 = vmatpush1.msra.mxu0 0.0
          %848 = vmatprep.subr.mxu0 0.0
          %849 = vmatpush1.msra.mxu0 0.0
          %850 = vmatprep.mubr.f32.mxu0 0.0
          %851 = vmatmul.mubr.f32.gmra.mrb[0].mxu0 %v781
          %v852 = vpop.f32.mrb[0].mxu0
          %v853 = vadd.f32 0.0, %v852
          %v854 = vpop.f32.mrb[0].mxu0
          %855 = vdwg.mxu0
          %v856 = vsub.f32 %v323, %v853
          %v857 = vmul.f32 %v856, 0.5
          %v858 = vsel %vm324, %v703, 0
          %v861 = vsel %vm328, %v857, 0
          %863 = vmatprep.subr.mxu0 0.0
          %864 = vmatpush1.msra.mxu0 %v861
          %865 = vmatprep.subr.mxu0 0.0
          %866 = vmatpush1.msra.mxu0 0.0
          %867 = vmatprep.subr.mxu0 0.0
          %868 = vmatpush1.msra.mxu0 0.0
          %869 = vmatprep.subr.mxu0 0.0
          %870 = vmatpush1.msra.mxu0 0.0
          %871 = vmatprep.subr.mxu0 0.0
          %872 = vmatpush1.msra.mxu0 0.0
          %873 = vmatprep.subr.mxu0 0.0
          %874 = vmatpush1.msra.mxu0 0.0
          %875 = vmatprep.subr.mxu0 0.0
          %876 = vmatpush1.msra.mxu0 0.0
          %877 = vmatprep.subr.mxu0 0.0
          %878 = vmatpush1.msra.mxu0 0.0
          %879 = vmatprep.subr.mxu0 0.0
          %880 = vmatpush1.msra.mxu0 0.0
          %881 = vmatprep.subr.mxu0 0.0
          %882 = vmatpush1.msra.mxu0 0.0
          %883 = vmatprep.subr.mxu0 0.0
          %884 = vmatpush1.msra.mxu0 0.0
          %885 = vmatprep.subr.mxu0 0.0
          %886 = vmatpush1.msra.mxu0 0.0
          %887 = vmatprep.subr.mxu0 0.0
          %888 = vmatpush1.msra.mxu0 0.0
          %889 = vmatprep.subr.mxu0 0.0
          %890 = vmatpush1.msra.mxu0 0.0
          %891 = vmatprep.subr.mxu0 0.0
          %892 = vmatpush1.msra.mxu0 0.0
          %893 = vmatprep.subr.mxu0 0.0
          %894 = vmatpush1.msra.mxu0 0.0
          %895 = vmatprep.subr.mxu0 0.0
          %896 = vmatpush1.msra.mxu0 0.0
          %897 = vmatprep.subr.mxu0 0.0
          %898 = vmatpush1.msra.mxu0 0.0
          %899 = vmatprep.subr.mxu0 0.0
          %900 = vmatpush1.msra.mxu0 0.0
          %901 = vmatprep.subr.mxu0 0.0
          %902 = vmatpush1.msra.mxu0 0.0
          %903 = vmatprep.subr.mxu0 0.0
          %904 = vmatpush1.msra.mxu0 0.0
          %905 = vmatprep.subr.mxu0 0.0
          %906 = vmatpush1.msra.mxu0 0.0
          %907 = vmatprep.subr.mxu0 0.0
          %908 = vmatpush1.msra.mxu0 0.0
          %909 = vmatprep.subr.mxu0 0.0
          %910 = vmatpush1.msra.mxu0 0.0
          %911 = vmatprep.subr.mxu0 0.0
          %912 = vmatpush1.msra.mxu0 0.0
          %913 = vmatprep.subr.mxu0 0.0
          %914 = vmatpush1.msra.mxu0 0.0
          %915 = vmatprep.subr.mxu0 0.0
          %916 = vmatpush1.msra.mxu0 0.0
          %917 = vmatprep.subr.mxu0 0.0
          %918 = vmatpush1.msra.mxu0 0.0
          %919 = vmatprep.subr.mxu0 0.0
          %920 = vmatpush1.msra.mxu0 0.0
          %921 = vmatprep.subr.mxu0 0.0
          %922 = vmatpush1.msra.mxu0 0.0
          %923 = vmatprep.subr.mxu0 0.0
          %924 = vmatpush1.msra.mxu0 0.0
          %925 = vmatprep.subr.mxu0 0.0
          %926 = vmatpush1.msra.mxu0 0.0
          %927 = vmatprep.mubr.f32.mxu0 0.0
          %928 = vmatmul.mubr.f32.gmra.mrb[0].mxu0 %v858
          %v929 = vpop.f32.mrb[0].mxu0
          %v930 = vadd.f32 0.0, %v929
          %v931 = vpop.f32.mrb[0].mxu0
          %932 = vdwg.mxu0
          %v933 = vsel %vm324, %v857, 0
          %v935 = vsel %vm328, %v777, 0
          %937 = vmatprep.subr.mxu0 0.0
          %938 = vmatpush1.msra.mxu0 %v935
          %939 = vmatprep.subr.mxu0 0.0
          %940 = vmatpush1.msra.mxu0 0.0
          %941 = vmatprep.subr.mxu0 0.0
          %942 = vmatpush1.msra.mxu0 0.0
          %943 = vmatprep.subr.mxu0 0.0
          %944 = vmatpush1.msra.mxu0 0.0
          %945 = vmatprep.subr.mxu0 0.0
          %946 = vmatpush1.msra.mxu0 0.0
          %947 = vmatprep.subr.mxu0 0.0
          %948 = vmatpush1.msra.mxu0 0.0
          %949 = vmatprep.subr.mxu0 0.0
          %950 = vmatpush1.msra.mxu0 0.0
          %951 = vmatprep.subr.mxu0 0.0
          %952 = vmatpush1.msra.mxu0 0.0
          %953 = vmatprep.subr.mxu0 0.0
          %954 = vmatpush1.msra.mxu0 0.0
          %955 = vmatprep.subr.mxu0 0.0
          %956 = vmatpush1.msra.mxu0 0.0
          %957 = vmatprep.subr.mxu0 0.0
          %958 = vmatpush1.msra.mxu0 0.0
          %959 = vmatprep.subr.mxu0 0.0
          %960 = vmatpush1.msra.mxu0 0.0
          %961 = vmatprep.subr.mxu0 0.0
          %962 = vmatpush1.msra.mxu0 0.0
          %963 = vmatprep.subr.mxu0 0.0
          %964 = vmatpush1.msra.mxu0 0.0
          %965 = vmatprep.subr.mxu0 0.0
          %966 = vmatpush1.msra.mxu0 0.0
          %967 = vmatprep.subr.mxu0 0.0
          %968 = vmatpush1.msra.mxu0 0.0
          %969 = vmatprep.subr.mxu0 0.0
          %970 = vmatpush1.msra.mxu0 0.0
          %971 = vmatprep.subr.mxu0 0.0
          %972 = vmatpush1.msra.mxu0 0.0
          %973 = vmatprep.subr.mxu0 0.0
          %974 = vmatpush1.msra.mxu0 0.0
          %975 = vmatprep.subr.mxu0 0.0
          %976 = vmatpush1.msra.mxu0 0.0
          %977 = vmatprep.subr.mxu0 0.0
          %978 = vmatpush1.msra.mxu0 0.0
          %979 = vmatprep.subr.mxu0 0.0
          %980 = vmatpush1.msra.mxu0 0.0
          %981 = vmatprep.subr.mxu0 0.0
          %982 = vmatpush1.msra.mxu0 0.0
          %983 = vmatprep.subr.mxu0 0.0
          %984 = vmatpush1.msra.mxu0 0.0
          %985 = vmatprep.subr.mxu0 0.0
          %986 = vmatpush1.msra.mxu0 0.0
          %987 = vmatprep.subr.mxu0 0.0
          %988 = vmatpush1.msra.mxu0 0.0
          %989 = vmatprep.subr.mxu0 0.0
          %990 = vmatpush1.msra.mxu0 0.0
          %991 = vmatprep.subr.mxu0 0.0
          %992 = vmatpush1.msra.mxu0 0.0
          %993 = vmatprep.subr.mxu0 0.0
          %994 = vmatpush1.msra.mxu0 0.0
          %995 = vmatprep.subr.mxu0 0.0
          %996 = vmatpush1.msra.mxu0 0.0
          %997 = vmatprep.subr.mxu0 0.0
          %998 = vmatpush1.msra.mxu0 0.0
          %999 = vmatprep.subr.mxu0 0.0
          %1000 = vmatpush1.msra.mxu0 0.0
          %1001 = vmatprep.mubr.f32.mxu0 0.0
          %1002 = vmatmul.mubr.f32.gmra.mrb[0].mxu0 %v933
          %v1003 = vpop.f32.mrb[0].mxu0
          %v1004 = vadd.f32 0.0, %v1003
          %v1005 = vpop.f32.mrb[0].mxu0
          %1006 = vdwg.mxu0
          %v1008 = vsel %vm324, %v1004, 0
          %v1011 = vsel %vm328, %v930, 0
          %1013 = vmatprep.subr.mxu0 0.0
          %1014 = vmatpush1.msra.mxu0 %v1011
          %1015 = vmatprep.subr.mxu0 0.0
          %1016 = vmatpush1.msra.mxu0 0.0
          %1017 = vmatprep.subr.mxu0 0.0
          %1018 = vmatpush1.msra.mxu0 0.0
          %1019 = vmatprep.subr.mxu0 0.0
          %1020 = vmatpush1.msra.mxu0 0.0
          %1021 = vmatprep.subr.mxu0 0.0
          %1022 = vmatpush1.msra.mxu0 0.0
          %1023 = vmatprep.subr.mxu0 0.0
          %1024 = vmatpush1.msra.mxu0 0.0
          %1025 = vmatprep.subr.mxu0 0.0
          %1026 = vmatpush1.msra.mxu0 0.0
          %1027 = vmatprep.subr.mxu0 0.0
          %1028 = vmatpush1.msra.mxu0 0.0
          %1029 = vmatprep.subr.mxu0 0.0
          %1030 = vmatpush1.msra.mxu0 0.0
          %1031 = vmatprep.subr.mxu0 0.0
          %1032 = vmatpush1.msra.mxu0 0.0
          %1033 = vmatprep.subr.mxu0 0.0
          %1034 = vmatpush1.msra.mxu0 0.0
          %1035 = vmatprep.subr.mxu0 0.0
          %1036 = vmatpush1.msra.mxu0 0.0
          %1037 = vmatprep.subr.mxu0 0.0
          %1038 = vmatpush1.msra.mxu0 0.0
          %1039 = vmatprep.subr.mxu0 0.0
          %1040 = vmatpush1.msra.mxu0 0.0
          %1041 = vmatprep.subr.mxu0 0.0
          %1042 = vmatpush1.msra.mxu0 0.0
          %1043 = vmatprep.subr.mxu0 0.0
          %1044 = vmatpush1.msra.mxu0 0.0
          %1045 = vmatprep.subr.mxu0 0.0
          %1046 = vmatpush1.msra.mxu0 0.0
          %1047 = vmatprep.subr.mxu0 0.0
          %1048 = vmatpush1.msra.mxu0 0.0
          %1049 = vmatprep.subr.mxu0 0.0
          %1050 = vmatpush1.msra.mxu0 0.0
          %1051 = vmatprep.subr.mxu0 0.0
          %1052 = vmatpush1.msra.mxu0 0.0
          %1053 = vmatprep.subr.mxu0 0.0
          %1054 = vmatpush1.msra.mxu0 0.0
          %1055 = vmatprep.subr.mxu0 0.0
          %1056 = vmatpush1.msra.mxu0 0.0
          %1057 = vmatprep.subr.mxu0 0.0
          %1058 = vmatpush1.msra.mxu0 0.0
          %1059 = vmatprep.subr.mxu0 0.0
          %1060 = vmatpush1.msra.mxu0 0.0
          %1061 = vmatprep.subr.mxu0 0.0
          %1062 = vmatpush1.msra.mxu0 0.0
          %1063 = vmatprep.subr.mxu0 0.0
          %1064 = vmatpush1.msra.mxu0 0.0
          %1065 = vmatprep.subr.mxu0 0.0
          %1066 = vmatpush1.msra.mxu0 0.0
          %1067 = vmatprep.subr.mxu0 0.0
          %1068 = vmatpush1.msra.mxu0 0.0
          %1069 = vmatprep.subr.mxu0 0.0
          %1070 = vmatpush1.msra.mxu0 0.0
          %1071 = vmatprep.subr.mxu0 0.0
          %1072 = vmatpush1.msra.mxu0 0.0
          %1073 = vmatprep.subr.mxu0 0.0
          %1074 = vmatpush1.msra.mxu0 0.0
          %1075 = vmatprep.subr.mxu0 0.0
          %1076 = vmatpush1.msra.mxu0 0.0
          %1077 = vmatprep.mubr.f32.mxu0 0.0
          %1078 = vmatmul.mubr.f32.gmra.mrb[0].mxu0 %v1008
          %v1079 = vpop.f32.mrb[0].mxu0
          %v1080 = vadd.f32 0.0, %v1079
          %v1081 = vpop.f32.mrb[0].mxu0
          %1082 = vdwg.mxu0
          %v1083 = vsub.f32 %v323, %v1080
          %v1084 = vmul.f32 %v1083, 0.5
          %v1085 = vsel %vm324, %v930, 0
          %v1088 = vsel %vm328, %v1084, 0
          %1090 = vmatprep.subr.mxu0 0.0
          %1091 = vmatpush1.msra.mxu0 %v1088
          %1092 = vmatprep.subr.mxu0 0.0
          %1093 = vmatpush1.msra.mxu0 0.0
          %1094 = vmatprep.subr.mxu0 0.0
          %1095 = vmatpush1.msra.mxu0 0.0
          %1096 = vmatprep.subr.mxu0 0.0
          %1097 = vmatpush1.msra.mxu0 0.0
          %1098 = vmatprep.subr.mxu0 0.0
          %1099 = vmatpush1.msra.mxu0 0.0
          %1100 = vmatprep.subr.mxu0 0.0
          %1101 = vmatpush1.msra.mxu0 0.0
          %1102 = vmatprep.subr.mxu0 0.0
          %1103 = vmatpush1.msra.mxu0 0.0
          %1104 = vmatprep.subr.mxu0 0.0
          %1105 = vmatpush1.msra.mxu0 0.0
          %1106 = vmatprep.subr.mxu0 0.0
          %1107 = vmatpush1.msra.mxu0 0.0
          %1108 = vmatprep.subr.mxu0 0.0
          %1109 = vmatpush1.msra.mxu0 0.0
          %1110 = vmatprep.subr.mxu0 0.0
          %1111 = vmatpush1.msra.mxu0 0.0
          %1112 = vmatprep.subr.mxu0 0.0
          %1113 = vmatpush1.msra.mxu0 0.0
          %1114 = vmatprep.subr.mxu0 0.0
          %1115 = vmatpush1.msra.mxu0 0.0
          %1116 = vmatprep.subr.mxu0 0.0
          %1117 = vmatpush1.msra.mxu0 0.0
          %1118 = vmatprep.subr.mxu0 0.0
          %1119 = vmatpush1.msra.mxu0 0.0
          %1120 = vmatprep.subr.mxu0 0.0
          %1121 = vmatpush1.msra.mxu0 0.0
          %1122 = vmatprep.subr.mxu0 0.0
          %1123 = vmatpush1.msra.mxu0 0.0
          %1124 = vmatprep.subr.mxu0 0.0
          %1125 = vmatpush1.msra.mxu0 0.0
          %1126 = vmatprep.subr.mxu0 0.0
          %1127 = vmatpush1.msra.mxu0 0.0
          %1128 = vmatprep.subr.mxu0 0.0
          %1129 = vmatpush1.msra.mxu0 0.0
          %1130 = vmatprep.subr.mxu0 0.0
          %1131 = vmatpush1.msra.mxu0 0.0
          %1132 = vmatprep.subr.mxu0 0.0
          %1133 = vmatpush1.msra.mxu0 0.0
          %1134 = vmatprep.subr.mxu0 0.0
          %1135 = vmatpush1.msra.mxu0 0.0
          %1136 = vmatprep.subr.mxu0 0.0
          %1137 = vmatpush1.msra.mxu0 0.0
          %1138 = vmatprep.subr.mxu0 0.0
          %1139 = vmatpush1.msra.mxu0 0.0
          %1140 = vmatprep.subr.mxu0 0.0
          %1141 = vmatpush1.msra.mxu0 0.0
          %1142 = vmatprep.subr.mxu0 0.0
          %1143 = vmatpush1.msra.mxu0 0.0
          %1144 = vmatprep.subr.mxu0 0.0
          %1145 = vmatpush1.msra.mxu0 0.0
          %1146 = vmatprep.subr.mxu0 0.0
          %1147 = vmatpush1.msra.mxu0 0.0
          %1148 = vmatprep.subr.mxu0 0.0
          %1149 = vmatpush1.msra.mxu0 0.0
          %1150 = vmatprep.subr.mxu0 0.0
          %1151 = vmatpush1.msra.mxu0 0.0
          %1152 = vmatprep.subr.mxu0 0.0
          %1153 = vmatpush1.msra.mxu0 0.0
          %1154 = vmatprep.mubr.f32.mxu0 0.0
          %1155 = vmatmul.mubr.f32.gmra.mrb[0].mxu0 %v1085
          %v1156 = vpop.f32.mrb[0].mxu0
          %v1157 = vadd.f32 0.0, %v1156
          %v1158 = vpop.f32.mrb[0].mxu0
          %1159 = vdwg.mxu0
          %v1160 = vsel %vm324, %v1084, 0
          %v1162 = vsel %vm328, %v1004, 0
          %1164 = vmatprep.subr.mxu0 0.0
          %1165 = vmatpush1.msra.mxu0 %v1162
          %1166 = vmatprep.subr.mxu0 0.0
          %1167 = vmatpush1.msra.mxu0 0.0
          %1168 = vmatprep.subr.mxu0 0.0
          %1169 = vmatpush1.msra.mxu0 0.0
          %1170 = vmatprep.subr.mxu0 0.0
          %1171 = vmatpush1.msra.mxu0 0.0
          %1172 = vmatprep.subr.mxu0 0.0
          %1173 = vmatpush1.msra.mxu0 0.0
          %1174 = vmatprep.subr.mxu0 0.0
          %1175 = vmatpush1.msra.mxu0 0.0
          %1176 = vmatprep.subr.mxu0 0.0
          %1177 = vmatpush1.msra.mxu0 0.0
          %1178 = vmatprep.subr.mxu0 0.0
          %1179 = vmatpush1.msra.mxu0 0.0
          %1180 = vmatprep.subr.mxu0 0.0
          %1181 = vmatpush1.msra.mxu0 0.0
          %1182 = vmatprep.subr.mxu0 0.0
          %1183 = vmatpush1.msra.mxu0 0.0
          %1184 = vmatprep.subr.mxu0 0.0
          %1185 = vmatpush1.msra.mxu0 0.0
          %1186 = vmatprep.subr.mxu0 0.0
          %1187 = vmatpush1.msra.mxu0 0.0
          %1188 = vmatprep.subr.mxu0 0.0
          %1189 = vmatpush1.msra.mxu0 0.0
          %1190 = vmatprep.subr.mxu0 0.0
          %1191 = vmatpush1.msra.mxu0 0.0
          %1192 = vmatprep.subr.mxu0 0.0
          %1193 = vmatpush1.msra.mxu0 0.0
          %1194 = vmatprep.subr.mxu0 0.0
          %1195 = vmatpush1.msra.mxu0 0.0
          %1196 = vmatprep.subr.mxu0 0.0
          %1197 = vmatpush1.msra.mxu0 0.0
          %1198 = vmatprep.subr.mxu0 0.0
          %1199 = vmatpush1.msra.mxu0 0.0
          %1200 = vmatprep.subr.mxu0 0.0
          %1201 = vmatpush1.msra.mxu0 0.0
          %1202 = vmatprep.subr.mxu0 0.0
          %1203 = vmatpush1.msra.mxu0 0.0
          %1204 = vmatprep.subr.mxu0 0.0
          %1205 = vmatpush1.msra.mxu0 0.0
          %1206 = vmatprep.subr.mxu0 0.0
          %1207 = vmatpush1.msra.mxu0 0.0
          %1208 = vmatprep.subr.mxu0 0.0
          %1209 = vmatpush1.msra.mxu0 0.0
          %1210 = vmatprep.subr.mxu0 0.0
          %1211 = vmatpush1.msra.mxu0 0.0
          %1212 = vmatprep.subr.mxu0 0.0
          %1213 = vmatpush1.msra.mxu0 0.0
          %1214 = vmatprep.subr.mxu0 0.0
          %1215 = vmatpush1.msra.mxu0 0.0
          %1216 = vmatprep.subr.mxu0 0.0
          %1217 = vmatpush1.msra.mxu0 0.0
          %1218 = vmatprep.subr.mxu0 0.0
          %1219 = vmatpush1.msra.mxu0 0.0
          %1220 = vmatprep.subr.mxu0 0.0
          %1221 = vmatpush1.msra.mxu0 0.0
          %1222 = vmatprep.subr.mxu0 0.0
          %1223 = vmatpush1.msra.mxu0 0.0
          %1224 = vmatprep.subr.mxu0 0.0
          %1225 = vmatpush1.msra.mxu0 0.0
          %1226 = vmatprep.subr.mxu0 0.0
          %1227 = vmatpush1.msra.mxu0 0.0
          %1228 = vmatprep.mubr.f32.mxu0 0.0
          %1229 = vmatmul.mubr.f32.gmra.mrb[0].mxu0 %v1160
          %v1230 = vpop.f32.mrb[0].mxu0
          %v1231 = vadd.f32 0.0, %v1230
          %v1232 = vpop.f32.mrb[0].mxu0
          %1233 = vdwg.mxu0
          %v1235 = vsel %vm324, %v1231, 0
          %v1238 = vsel %vm328, %v1157, 0
          %1240 = vmatprep.subr.mxu0 0.0
          %1241 = vmatpush1.msra.mxu0 %v1238
          %1242 = vmatprep.subr.mxu0 0.0
          %1243 = vmatpush1.msra.mxu0 0.0
          %1244 = vmatprep.subr.mxu0 0.0
          %1245 = vmatpush1.msra.mxu0 0.0
          %1246 = vmatprep.subr.mxu0 0.0
          %1247 = vmatpush1.msra.mxu0 0.0
          %1248 = vmatprep.subr.mxu0 0.0
          %1249 = vmatpush1.msra.mxu0 0.0
          %1250 = vmatprep.subr.mxu0 0.0
          %1251 = vmatpush1.msra.mxu0 0.0
          %1252 = vmatprep.subr.mxu0 0.0
          %1253 = vmatpush1.msra.mxu0 0.0
          %1254 = vmatprep.subr.mxu0 0.0
          %1255 = vmatpush1.msra.mxu0 0.0
          %1256 = vmatprep.subr.mxu0 0.0
          %1257 = vmatpush1.msra.mxu0 0.0
          %1258 = vmatprep.subr.mxu0 0.0
          %1259 = vmatpush1.msra.mxu0 0.0
          %1260 = vmatprep.subr.mxu0 0.0
          %1261 = vmatpush1.msra.mxu0 0.0
          %1262 = vmatprep.subr.mxu0 0.0
          %1263 = vmatpush1.msra.mxu0 0.0
          %1264 = vmatprep.subr.mxu0 0.0
          %1265 = vmatpush1.msra.mxu0 0.0
          %1266 = vmatprep.subr.mxu0 0.0
          %1267 = vmatpush1.msra.mxu0 0.0
          %1268 = vmatprep.subr.mxu0 0.0
          %1269 = vmatpush1.msra.mxu0 0.0
          %1270 = vmatprep.subr.mxu0 0.0
          %1271 = vmatpush1.msra.mxu0 0.0
          %1272 = vmatprep.subr.mxu0 0.0
          %1273 = vmatpush1.msra.mxu0 0.0
          %1274 = vmatprep.subr.mxu0 0.0
          %1275 = vmatpush1.msra.mxu0 0.0
          %1276 = vmatprep.subr.mxu0 0.0
          %1277 = vmatpush1.msra.mxu0 0.0
          %1278 = vmatprep.subr.mxu0 0.0
          %1279 = vmatpush1.msra.mxu0 0.0
          %1280 = vmatprep.subr.mxu0 0.0
          %1281 = vmatpush1.msra.mxu0 0.0
          %1282 = vmatprep.subr.mxu0 0.0
          %1283 = vmatpush1.msra.mxu0 0.0
          %1284 = vmatprep.subr.mxu0 0.0
          %1285 = vmatpush1.msra.mxu0 0.0
          %1286 = vmatprep.subr.mxu0 0.0
          %1287 = vmatpush1.msra.mxu0 0.0
          %1288 = vmatprep.subr.mxu0 0.0
          %1289 = vmatpush1.msra.mxu0 0.0
          %1290 = vmatprep.subr.mxu0 0.0
          %1291 = vmatpush1.msra.mxu0 0.0
          %1292 = vmatprep.subr.mxu0 0.0
          %1293 = vmatpush1.msra.mxu0 0.0
          %1294 = vmatprep.subr.mxu0 0.0
          %1295 = vmatpush1.msra.mxu0 0.0
          %1296 = vmatprep.subr.mxu0 0.0
          %1297 = vmatpush1.msra.mxu0 0.0
          %1298 = vmatprep.subr.mxu0 0.0
          %1299 = vmatpush1.msra.mxu0 0.0
          %1300 = vmatprep.subr.mxu0 0.0
          %1301 = vmatpush1.msra.mxu0 0.0
          %1302 = vmatprep.subr.mxu0 0.0
          %1303 = vmatpush1.msra.mxu0 0.0
          %1304 = vmatprep.mubr.f32.mxu0 0.0
          %1305 = vmatmul.mubr.f32.gmra.mrb[0].mxu0 %v1235
          %v1306 = vpop.f32.mrb[0].mxu0
          %v1307 = vadd.f32 0.0, %v1306
          %v1308 = vpop.f32.mrb[0].mxu0
          %1309 = vdwg.mxu0
          %v1310 = vsub.f32 %v323, %v1307
          %v1311 = vmul.f32 %v1310, 0.5
          %v1313 = vsel %vm324, %v1311, 0
          %v1315 = vsel %vm328, %v1231, 0
          %1317 = vmatprep.subr.mxu0 0.0
          %1318 = vmatpush1.msra.mxu0 %v1315
          %1319 = vmatprep.subr.mxu0 0.0
          %1320 = vmatpush1.msra.mxu0 0.0
          %1321 = vmatprep.subr.mxu0 0.0
          %1322 = vmatpush1.msra.mxu0 0.0
          %1323 = vmatprep.subr.mxu0 0.0
          %1324 = vmatpush1.msra.mxu0 0.0
          %1325 = vmatprep.subr.mxu0 0.0
          %1326 = vmatpush1.msra.mxu0 0.0
          %1327 = vmatprep.subr.mxu0 0.0
          %1328 = vmatpush1.msra.mxu0 0.0
          %1329 = vmatprep.subr.mxu0 0.0
          %1330 = vmatpush1.msra.mxu0 0.0
          %1331 = vmatprep.subr.mxu0 0.0
          %1332 = vmatpush1.msra.mxu0 0.0
          %1333 = vmatprep.subr.mxu0 0.0
          %1334 = vmatpush1.msra.mxu0 0.0
          %1335 = vmatprep.subr.mxu0 0.0
          %1336 = vmatpush1.msra.mxu0 0.0
          %1337 = vmatprep.subr.mxu0 0.0
          %1338 = vmatpush1.msra.mxu0 0.0
          %1339 = vmatprep.subr.mxu0 0.0
          %1340 = vmatpush1.msra.mxu0 0.0
          %1341 = vmatprep.subr.mxu0 0.0
          %1342 = vmatpush1.msra.mxu0 0.0
          %1343 = vmatprep.subr.mxu0 0.0
          %1344 = vmatpush1.msra.mxu0 0.0
          %1345 = vmatprep.subr.mxu0 0.0
          %1346 = vmatpush1.msra.mxu0 0.0
          %1347 = vmatprep.subr.mxu0 0.0
          %1348 = vmatpush1.msra.mxu0 0.0
          %1349 = vmatprep.subr.mxu0 0.0
          %1350 = vmatpush1.msra.mxu0 0.0
          %1351 = vmatprep.subr.mxu0 0.0
          %1352 = vmatpush1.msra.mxu0 0.0
          %1353 = vmatprep.subr.mxu0 0.0
          %1354 = vmatpush1.msra.mxu0 0.0
          %1355 = vmatprep.subr.mxu0 0.0
          %1356 = vmatpush1.msra.mxu0 0.0
          %1357 = vmatprep.subr.mxu0 0.0
          %1358 = vmatpush1.msra.mxu0 0.0
          %1359 = vmatprep.subr.mxu0 0.0
          %1360 = vmatpush1.msra.mxu0 0.0
          %1361 = vmatprep.subr.mxu0 0.0
          %1362 = vmatpush1.msra.mxu0 0.0
          %1363 = vmatprep.subr.mxu0 0.0
          %1364 = vmatpush1.msra.mxu0 0.0
          %1365 = vmatprep.subr.mxu0 0.0
          %1366 = vmatpush1.msra.mxu0 0.0
          %1367 = vmatprep.subr.mxu0 0.0
          %1368 = vmatpush1.msra.mxu0 0.0
          %1369 = vmatprep.subr.mxu0 0.0
          %1370 = vmatpush1.msra.mxu0 0.0
          %1371 = vmatprep.subr.mxu0 0.0
          %1372 = vmatpush1.msra.mxu0 0.0
          %1373 = vmatprep.subr.mxu0 0.0
          %1374 = vmatpush1.msra.mxu0 0.0
          %1375 = vmatprep.subr.mxu0 0.0
          %1376 = vmatpush1.msra.mxu0 0.0
          %1377 = vmatprep.subr.mxu0 0.0
          %1378 = vmatpush1.msra.mxu0 0.0
          %1379 = vmatprep.subr.mxu0 0.0
          %1380 = vmatpush1.msra.mxu0 0.0
          %1381 = vmatprep.mubr.f32.mxu0 0.0
          %1382 = vmatmul.mubr.f32.gmra.mrb[0].mxu0 %v1313
          %v1383 = vpop.f32.mrb[0].mxu0
          %v1384 = vadd.f32 0.0, %v1383
          %v1385 = vpop.f32.mrb[0].mxu0
          %1386 = vdwg.mxu0
          %v1387 = vstv %s319
          %v1388 = vrsqrt.pop %v1387
          %v1389 = vmul.f32 %v1387, %v1388
          %vm1390 = vcmp.eq.f32.partialorder %v1387, inf
          %v1391 = vsel %vm1390, %v1387, %v1389
          %vm1392 = vcmp.eq.f32.partialorder %v1387, 0.0
          %v1393 = vand.u32 %v1387, 2147483648
          %v1394 = vsel %vm1392, %v1393, %v1391
          %s1395 = vtos %v1394
          %v1396 = vstv %s1395
          %v1397 = vrcp.pop %v1396
          %v1398 = vmul.f32 %v1384, %v1397
          %1399 = vst.msk [vmem:[%s1] sm:$0xf] %vm201, %v295
          %1400 = vst.msk [vmem:[#allocation5] sm:$0xf] %vm279, %v1398
          %v1402 = vsel %vm324, %v1398, 0
          %v1405 = vsel %vm328, %v295, 0
          %1407 = vmatprep.subr.mxu0 0.0
          %1408 = vmatpush1.msra.mxu0 %v1405
          %1409 = vmatprep.subr.mxu0 0.0
          %1410 = vmatpush1.msra.mxu0 0.0
          %1411 = vmatprep.subr.mxu0 0.0
          %1412 = vmatpush1.msra.mxu0 0.0
          %1413 = vmatprep.subr.mxu0 0.0
          %1414 = vmatpush1.msra.mxu0 0.0
          %1415 = vmatprep.subr.mxu0 0.0
          %1416 = vmatpush1.msra.mxu0 0.0
          %1417 = vmatprep.subr.mxu0 0.0
          %1418 = vmatpush1.msra.mxu0 0.0
          %1419 = vmatprep.subr.mxu0 0.0
          %1420 = vmatpush1.msra.mxu0 0.0
          %1421 = vmatprep.subr.mxu0 0.0
          %1422 = vmatpush1.msra.mxu0 0.0
          %1423 = vmatprep.subr.mxu0 0.0
          %1424 = vmatpush1.msra.mxu0 0.0
          %1425 = vmatprep.subr.mxu0 0.0
          %1426 = vmatpush1.msra.mxu0 0.0
          %1427 = vmatprep.subr.mxu0 0.0
          %1428 = vmatpush1.msra.mxu0 0.0
          %1429 = vmatprep.subr.mxu0 0.0
          %1430 = vmatpush1.msra.mxu0 0.0
          %1431 = vmatprep.subr.mxu0 0.0
          %1432 = vmatpush1.msra.mxu0 0.0
          %1433 = vmatprep.subr.mxu0 0.0
          %1434 = vmatpush1.msra.mxu0 0.0
          %1435 = vmatprep.subr.mxu0 0.0
          %1436 = vmatpush1.msra.mxu0 0.0
          %1437 = vmatprep.subr.mxu0 0.0
          %1438 = vmatpush1.msra.mxu0 0.0
          %1439 = vmatprep.subr.mxu0 0.0
          %1440 = vmatpush1.msra.mxu0 0.0
          %1441 = vmatprep.subr.mxu0 0.0
          %1442 = vmatpush1.msra.mxu0 0.0
          %1443 = vmatprep.subr.mxu0 0.0
          %1444 = vmatpush1.msra.mxu0 0.0
          %1445 = vmatprep.subr.mxu0 0.0
          %1446 = vmatpush1.msra.mxu0 0.0
          %1447 = vmatprep.subr.mxu0 0.0
          %1448 = vmatpush1.msra.mxu0 0.0
          %1449 = vmatprep.subr.mxu0 0.0
          %1450 = vmatpush1.msra.mxu0 0.0
          %1451 = vmatprep.subr.mxu0 0.0
          %1452 = vmatpush1.msra.mxu0 0.0
          %1453 = vmatprep.subr.mxu0 0.0
          %1454 = vmatpush1.msra.mxu0 0.0
          %1455 = vmatprep.subr.mxu0 0.0
          %1456 = vmatpush1.msra.mxu0 0.0
          %1457 = vmatprep.subr.mxu0 0.0
          %1458 = vmatpush1.msra.mxu0 0.0
          %1459 = vmatprep.subr.mxu0 0.0
          %1460 = vmatpush1.msra.mxu0 0.0
          %1461 = vmatprep.subr.mxu0 0.0
          %1462 = vmatpush1.msra.mxu0 0.0
          %1463 = vmatprep.subr.mxu0 0.0
          %1464 = vmatpush1.msra.mxu0 0.0
          %1465 = vmatprep.subr.mxu0 0.0
          %1466 = vmatpush1.msra.mxu0 0.0
          %1467 = vmatprep.subr.mxu0 0.0
          %1468 = vmatpush1.msra.mxu0 0.0
          %1469 = vmatprep.subr.mxu0 0.0
          %1470 = vmatpush1.msra.mxu0 0.0
          %1471 = vmatprep.mubr.f32.mxu0 0.0
          %1472 = vmatmul.mubr.f32.gmra.mrb[0].mxu0 %v1402
          %v1473 = vpop.f32.mrb[0].mxu0
          %v1474 = vadd.f32 0.0, %v1473
          %v1475 = vpop.f32.mrb[0].mxu0
          %1476 = vdwg.mxu0
          %v1477 = vsub.f32 0.0, %v1474
          %1478 = vst.msk [vmem:[%s3] sm:$0xf] %vm201, %v1477
        $region36: #{tpu_custom_call.1} parent=23 // pred_fallthru
          _
        // Predicated region
        $region37: #{tpu_custom_call.1} parent=23 // pred_check
          %p1479 = pneg %p72
        $region38: #{tpu_custom_call.1} parent=23 // pred_check_branch
          %1481 = sbr.rel (%p1479) target = $region40
        $region39: #{tpu_custom_call.1} parent=23 // pred_region
          _
        $region40: #{tpu_custom_call.1} parent=23 // pred_fallthru
          _
        // Predicated region
        $region41: #{tpu_custom_call.1} parent=23 // pred_check
          %p1482 = pneg %p93
        $region42: #{tpu_custom_call.1} parent=23 // pred_check_branch
          %1484 = sbr.rel (%p1482) target = $region44
        $region43: #{tpu_custom_call.1} parent=23 // pred_region
          %s1486 = ssub.s32 64, 64
          %1487 = vsyncadd [#allocation4], %s1486
          %s1489 = sshll.u32 [#allocation5], 4
          %s1490 = int_to_ptr.vmem [resolvable:$true] %s1489
          %1492 = dma.vmem_to_hbm [thread:$0]  %s1490, 64, %s2, [#allocation4]
        $region44: #{tpu_custom_call.1} parent=23 // pred_fallthru
          _
        // Predicated region
        $region45: #{tpu_custom_call.1} parent=23 // pred_check
          %p1493 = pneg %p114
        $region46: #{tpu_custom_call.1} parent=23 // pred_check_branch
          %1495 = sbr.rel (%p1493) target = $region48
        $region47: #{tpu_custom_call.1} parent=23 // pred_region
          _
        $region48: #{tpu_custom_call.1} parent=23 // pred_fallthru
          _
        // Predicated region
        $region49: #{tpu_custom_call.1} parent=23 // pred_check
          %p1496 = pneg %p72
        $region50: #{tpu_custom_call.1} parent=23 // pred_check_branch
          %1498 = sbr.rel (%p1496) target = $region52
        $region51: #{tpu_custom_call.1} parent=23 // pred_region
          _
        $region52: #{tpu_custom_call.1} parent=23 // pred_fallthru
          _
        // Predicated region
        $region53: #{tpu_custom_call.1} parent=23 // pred_check
          %p1499 = pneg %p93
        $region54: #{tpu_custom_call.1} parent=23 // pred_check_branch
          %1501 = sbr.rel (%p1499) target = $region56
        $region55: #{tpu_custom_call.1} parent=23 // pred_region
          %1502 = dma.done [#allocation4], 64
        $region56: #{tpu_custom_call.1} parent=23 // pred_fallthru
          _
        // Predicated region
        $region57: #{tpu_custom_call.1} parent=23 // pred_check
          %p1503 = pneg %p114
        $region58: #{tpu_custom_call.1} parent=23 // pred_check_branch
          %1505 = sbr.rel (%p1503) target = $region60
        $region59: #{tpu_custom_call.1} parent=23 // pred_region
          _
        $region60: #{tpu_custom_call.1} parent=23 // pred_fallthru
          _
      $region24: #{tpu_custom_call.1} parent=5 // pred_fallthru
        _
      %p1506 = scmp.le.s32.totalorder 2, %s14
      // Predicated region
      $region61: #{tpu_custom_call.1} parent=5 // pred_check
        %p1507 = pneg %p1506
      $region62: #{tpu_custom_call.1} parent=5 // pred_check_branch
        %1509 = sbr.rel (%p1507) target = $region64
      $region63: #{tpu_custom_call.1} parent=5 // pred_region
        %s1510 = ssub.s32 %s14, 2
      $region64: #{tpu_custom_call.1} parent=5 // pred_fallthru
        _
    $region6: #{tpu_custom_call.1} parent=1 // loop_footer
      %s18 = sadd.s32 1, %s14
    $region7: #{tpu_custom_call.1} parent=1 // loop_footer_branch
      %13 = sbr.rel target = $region3
    $region8: #{tpu_custom_call.1} parent=1 // loop_exit
      _
    %1511 = vsyncpa [#allocation3], 1
    %s1512 = scalar_lea.sflag [#allocation3], 1
    %1513 = vsyncpa %s1512, 1
    %1514 = vsyncpa [#allocation4], 1
    %s1515 = scalar_lea.sflag [#allocation4], 1
    %1516 = vsyncpa %s1515, 1

</llo_original>
